<compile_context>
chip_gen: v7x
topology: tpu7x:2x2x1
jax: 0.10.0
libtpu: 0.0.40
codegen_flags: <defaults>
</compile_context>

<pallas_src>
import jax
import jax.numpy as jnp
from jax import lax
from jax.experimental import pallas as pl
from jax.experimental.pallas import tpu as pltpu

LEVELS = 4          # MultiScaleGradientMatchingLoss(levels=4)
TRIM_FACTOR = 0.1   # AffineInvariantLoss(trim_factor); its topk is dead code upstream.

# Wide (8, W) accumulator layout.
_AI_GT_SUM = 0      # sum |gt - t_gt| over non-NaN gt
_AI_GT_CNT = 1      # count of non-NaN gt
_AI_PR_SUM = 2      # sum |pr - t_pr| over non-NaN pr
_AI_PR_CNT = 3      # count of non-NaN pr
_AI_DIFF_SUM = 4    # sum |scaled_pr - scaled_gt| over valid gt  (phase 1)
_GM_BASE = 5        # + 4*k + {0: dx_sum, 1: dx_cnt, 2: dy_sum, 3: dy_cnt}
_N_WIDE = _GM_BASE + 4 * LEVELS


def _fold8(x):
    """(R, W) -> (8, W) by summing aligned groups of 8 rows (pure VPU adds)."""
    r, _ = x.shape
    acc = x[0:8, :]
    for i in range(1, r // 8):
        acc = acc + x[8 * i:8 * (i + 1), :]
    return acc


def _reduce_to_1x1(x):
    """(8, W) -> (1, 1): the single cross-lane/sublane reduce per accumulator."""
    return jnp.sum(jnp.sum(x, axis=1, keepdims=True), axis=0, keepdims=True)


def _make_kernel(tile_h, width, inv_total):
    TH, W = tile_h, width

    def kernel(med_ref, gt_ref, pr_ref, out_ref, acc_ref, mask_ref, carry_ref,
               stat_ref):
        phase = pl.program_id(0)
        b = pl.program_id(1)
        t = pl.program_id(2)
        nb = pl.num_programs(1)
        nt = pl.num_programs(2)
        is_last_bt = (b == nb - 1) & (t == nt - 1)

        # ------- one-time init: zero accumulators + build static level masks --
        @pl.when((phase == 0) & (b == 0) & (t == 0))
        def _init():
            acc_ref[...] = jnp.zeros_like(acc_ref)
            row = lax.broadcasted_iota(jnp.int32, (TH, W), 0)
            col = lax.broadcasted_iota(jnp.int32, (TH, W), 1)
            for k in range(LEVELS):
                s = 1 << k
                sub = ((row & (s - 1)) == 0) & ((col & (s - 1)) == 0)
                mask_ref[2 * k] = (sub & (col < (W - s))).astype(jnp.float32)
                mask_ref[2 * k + 1] = (sub & (row < (TH - s))).astype(jnp.float32)

        # ---------------- phase 0: scale statistics + all GM partial sums ----
        @pl.when(phase == 0)
        def _phase0():
            gt = gt_ref[...].astype(jnp.float32)   # (TH, W)
            pr = pr_ref[...].astype(jnp.float32)
            t_gt = med_ref[0]
            t_pr = med_ref[1]

            # nanmean statistics: exclude NaN only (matches torch.nanmean).
            nn_gt = jnp.logical_not(jnp.isnan(gt))
            nn_pr = jnp.logical_not(jnp.isnan(pr))
            acc_ref[_AI_GT_SUM] += _fold8(jnp.where(nn_gt, jnp.abs(gt - t_gt), 0.0))
            acc_ref[_AI_GT_CNT] += _fold8(nn_gt.astype(jnp.float32))
            acc_ref[_AI_PR_SUM] += _fold8(jnp.where(nn_pr, jnp.abs(pr - t_pr), 0.0))
            acc_ref[_AI_PR_CNT] += _fold8(nn_pr.astype(jnp.float32))

            # Single difference field + gt finiteness; everything GM uses these.
            # (|roll(d)-d| == |gt_dx - pred_dx|; validity via roll(fin)&fin
            #  instead of isfinite(gt_dx) — differs only if a finite-finite gt
            #  subtraction overflows to Inf, irrelevant for disparity maps.)
            d = pr - gt
            fin_f = jnp.isfinite(gt).astype(jnp.float32)

            # dy pairs that straddle the previous row-tile boundary (per level).
            @pl.when(t > 0)
            def _boundary():
                col0 = lax.broadcasted_iota(jnp.int32, (1, W), 1)
                d0 = d[0:1, :]
                f0 = fin_f[0:1, :]
                for k in range(LEVELS):
                    s = 1 << k
                    ddy = d0 - carry_ref[2 * k]
                    keep_f = f0 * carry_ref[2 * k + 1]
                    if s > 1:
                        keep_f = keep_f * ((col0 & (s - 1)) == 0).astype(jnp.float32)
                    acc_ref[_GM_BASE + 4 * k + 2, 0:1, :] += jnp.where(
                        keep_f > 0.0, jnp.abs(ddy), 0.0)
                    acc_ref[_GM_BASE + 4 * k + 3, 0:1, :] += keep_f

            # In-tile dx / dy for every pyramid level, on the full-resolution
            # tile via stride-2^k rolls + precomputed static masks (nearest
            # 1/2^k downsample == rows/cols at multiples of 2^k).
            for k in range(LEVELS):
                s = 1 << k
                if s < W:   # dx_k[r, c] = x[r, c+s] - x[r, c]
                    ddx = pltpu.roll(d, W - s, axis=1) - d
                    keep_f = (pltpu.roll(fin_f, W - s, axis=1) * fin_f
                              * mask_ref[2 * k])
                    acc_ref[_GM_BASE + 4 * k + 0] += _fold8(
                        jnp.where(keep_f > 0.0, jnp.abs(ddx), 0.0))
                    acc_ref[_GM_BASE + 4 * k + 1] += _fold8(keep_f)
                if s < TH:  # dy_k[r, c] = x[r+s, c] - x[r, c]  (within tile)
                    ddy = pltpu.roll(d, TH - s, axis=0) - d
                    keep_f = (pltpu.roll(fin_f, TH - s, axis=0) * fin_f
                              * mask_ref[2 * k + 1])
                    acc_ref[_GM_BASE + 4 * k + 2] += _fold8(
                        jnp.where(keep_f > 0.0, jnp.abs(ddy), 0.0))
                    acc_ref[_GM_BASE + 4 * k + 3] += _fold8(keep_f)

            # Carry the last kept row of each level for the next tile's dy.
            for k in range(LEVELS):
                s = 1 << k
                carry_ref[2 * k] = d[TH - s:TH - s + 1, :]
                carry_ref[2 * k + 1] = fin_f[TH - s:TH - s + 1, :]

        # End of phase 0: finalize 1/s_gt, 1/s_pred (exact, runs once).
        @pl.when((phase == 0) & is_last_bt)
        def _finalize_scales():
            s_gt = (_reduce_to_1x1(acc_ref[_AI_GT_SUM])
                    / _reduce_to_1x1(acc_ref[_AI_GT_CNT]))
            s_pr = (_reduce_to_1x1(acc_ref[_AI_PR_SUM])
                    / _reduce_to_1x1(acc_ref[_AI_PR_CNT]))
            stat_ref[0] = (1.0 / s_gt)[0, 0]
            stat_ref[1] = (1.0 / s_pr)[0, 0]

        # ---------------- phase 1: affine-invariant scaled difference --------
        @pl.when(phase == 1)
        def _phase1():
            gt = gt_ref[...].astype(jnp.float32)
            pr = pr_ref[...].astype(jnp.float32)
            sc_gt = (gt - med_ref[0]) * stat_ref[0]
            sc_pr = (pr - med_ref[1]) * stat_ref[1]
            valid = jnp.isfinite(sc_gt)
            acc_ref[_AI_DIFF_SUM] += _fold8(
                jnp.where(valid, jnp.abs(sc_pr - sc_gt), 0.0))

        # Final grid step: one reduction per accumulator + scalar output.
        @pl.when((phase == 1) & is_last_bt)
        def _finalize():
            ai = _reduce_to_1x1(acc_ref[_AI_DIFF_SUM]) * inv_total
            gm = jnp.zeros((1, 1), jnp.float32)
            for k in range(LEVELS):
                base = _GM_BASE + 4 * k
                dx = (_reduce_to_1x1(acc_ref[base + 0])
                      / _reduce_to_1x1(acc_ref[base + 1]))
                dy = (_reduce_to_1x1(acc_ref[base + 2])
                      / _reduce_to_1x1(acc_ref[base + 3]))
                gm = gm + 0.5 * (dx + dy)
            out_ref[...] = ai + 0.5 * (gm * (1.0 / LEVELS))

    return kernel


def _nanmedian_lower(x):
    """torch.nanmedian (lower median, NaNs ignored) via exact MSD radix select.

    Four 256-bin histogram passes over the data instead of an O(n log n) sort.
    TODO(synk): fold the histogram passes into a small streaming Pallas kernel.
    """
    flat = jnp.ravel(x).astype(jnp.float32)
    nan = jnp.isnan(flat)
    n_valid = jnp.sum(jnp.logical_not(nan)).astype(jnp.int32)
    k = jnp.maximum(n_valid - 1, 0) // 2            # 0-indexed rank (lower median)

    bits = lax.bitcast_convert_type(flat, jnp.uint32)
    # Monotonic IEEE-754 -> uint32 key; NaNs forced to the largest key.
    key = jnp.where((bits >> 31) != 0, ~bits, bits | jnp.uint32(0x80000000))
    key = jnp.where(nan, jnp.uint32(0xFFFFFFFF), key)

    cand = jnp.ones(flat.shape, dtype=jnp.int32)    # candidate indicator
    prefix = jnp.uint32(0)
    k_rem = k
    for shift in (24, 16, 8, 0):
        digit = ((key >> shift) & jnp.uint32(0xFF)).astype(jnp.int32)
        hist = jnp.zeros((256,), jnp.int32).at[digit].add(cand)
        csum = jnp.cumsum(hist)
        d_sel = jnp.argmax(csum > k_rem).astype(jnp.int32)
        k_rem = k_rem - (csum[d_sel] - hist[d_sel])
        cand = cand * (digit == d_sel).astype(jnp.int32)
        prefix = prefix | (d_sel.astype(jnp.uint32) << jnp.uint32(shift))

    sel_bits = jnp.where((prefix & jnp.uint32(0x80000000)) != 0,
                         prefix ^ jnp.uint32(0x80000000), ~prefix)
    return lax.bitcast_convert_type(sel_bits, jnp.float32)


def _vmem_capacity_bytes():
    try:
        return int(pltpu.get_tpu_info().vmem_capacity_bytes)
    except Exception:
        return 64 << 20   # conservative (v7x-sized) fallback


def _per_tile_bytes_per_row(w, itemsize):
    # double-buffered gt/pred tiles + static level/dir masks (f32) + estimated
    # live f32 temporaries from the statically unrolled level loop.
    return w * (2 * 2 * itemsize + 4 * (2 * LEVELS) + 4 * 10)


def _pick_tile_h(h, w, itemsize, vmem_cap):
    budget = max(int(0.40 * vmem_cap), 4 << 20)
    budget_rows = max(budget // _per_tile_bytes_per_row(w, itemsize), 8)
    th = max(8, (min(h, budget_rows) // 8) * 8)
    while h % th:
        th -= 8
    return th


def combined_loss(disparity_map_gt, disparity_map_pred, *, tile_h=None):
    assert disparity_map_gt.ndim == 4
    assert disparity_map_gt.shape == disparity_map_pred.shape
    n, c, h, w = disparity_map_gt.shape
    assert h % 8 == 0 and w % 8 == 0, "H and W must be multiples of 8"
    bsz = n * c
    gt = disparity_map_gt.reshape(bsz, h, w)     # keep input dtype (bf16 ok)
    pr = disparity_map_pred.reshape(bsz, h, w)

    # Global lower nanmedians (glue: global order statistic), on unpadded data.
    meds = jnp.stack([_nanmedian_lower(gt), _nanmedian_lower(pr)]).astype(jnp.float32)

    # Lane-dense tiles: pad W to a multiple of 128 with NaN.  NaN pads are
    # excluded by every validity mask, so all sums / counts / denominators are
    # identical to the unpadded reference.
    wp = ((w + 127) // 128) * 128
    if wp != w:
        pad = ((0, 0), (0, 0), (0, wp - w))
        gt = jnp.pad(gt, pad, constant_values=float("nan"))
        pr = jnp.pad(pr, pad, constant_values=float("nan"))

    vmem_cap = _vmem_capacity_bytes()
    itemsize = gt.dtype.itemsize
    th = tile_h if tile_h is not None else _pick_tile_h(h, wp, itemsize, vmem_cap)
    assert th % 8 == 0 and h % th == 0
    grid = (2, bsz, h // th)                     # (phase, batch, row-tile)

    kernel = _make_kernel(th, wp, 1.0 / float(bsz * h * w))

    in_specs = [
        pl.BlockSpec(memory_space=pltpu.MemorySpace.SMEM),             # medians
        pl.BlockSpec((None, th, wp), lambda p, bi, ti: (bi, ti, 0)),   # gt tile
        pl.BlockSpec((None, th, wp), lambda p, bi, ti: (bi, ti, 0)),   # pred tile
    ]
    out_spec = pl.BlockSpec((1, 1), lambda p, bi, ti: (0, 0))

    scratch_shapes = [
        pltpu.VMEM((_N_WIDE, 8, wp), jnp.float32),       # vreg-resident partial sums
        pltpu.VMEM((2 * LEVELS, th, wp), jnp.float32),   # static level/dir masks
        pltpu.VMEM((2 * LEVELS, 1, wp), jnp.float32),    # carried d / fin rows (dy)
        pltpu.SMEM((2,), jnp.float32),                   # 1/s_gt, 1/s_pred
    ]

    # Generation-aware scoped-VMEM sizing: working set + headroom, capped at
    # 60% of physical VMEM (64 MiB on v7x, 128 MiB on v5e/v6e).
    per_tile = th * _per_tile_bytes_per_row(wp, itemsize)
    fixed = (_N_WIDE * 8 + 2 * LEVELS) * wp * 4
    vmem_limit = int(min(max(per_tile + fixed + (4 << 20), 16 << 20),
                         int(0.60 * vmem_cap)))

    out = pl.pallas_call(
        kernel,
        out_shape=jax.ShapeDtypeStruct((1, 1), jnp.float32),
        grid=grid,
        in_specs=in_specs,
        out_specs=out_spec,
        scratch_shapes=scratch_shapes,
        compiler_params=pltpu.CompilerParams(
            dimension_semantics=("arbitrary", "arbitrary", "arbitrary"),
            vmem_limit_bytes=vmem_limit,
        ),
    )(meds, gt, pr)
    return out[0, 0]


if __name__ == "__main__":
    key = jax.random.PRNGKey(0)
    k1, k2 = jax.random.split(key)
    # Disparity-map-like inputs: N=2, C=1, H=W=16.
    gt = jax.random.uniform(k1, (2, 1, 16, 16), jnp.float32, 0.1, 10.0)
    pred = gt + 0.3 * jax.random.normal(k2, (2, 1, 16, 16), jnp.float32)

    # tile_h=8 forces 2 row tiles per image so the cross-tile dy carry path runs.
    loss = combined_loss(gt, pred, tile_h=8)
    jax.block_until_ready(loss)
    print("KERNEL_OK")
</pallas_src>

<mosaic_0001>
module attributes {stable_mosaic.version = 11 : i64} {
  func.func @kernel(%arg0: i32, %arg1: i32, %arg2: i32, %arg3: memref<2xf32, #tpu.memory_space<smem>>, %arg4: memref<1x8x128xf32, #tpu.memory_space<vmem>>, %arg5: memref<1x8x128xf32, #tpu.memory_space<vmem>>, %arg6: memref<1x1xf32, #tpu.memory_space<vmem>>, %arg7: memref<21x8x128xf32, #tpu.memory_space<vmem>>, %arg8: memref<8x8x128xf32, #tpu.memory_space<vmem>>, %arg9: memref<8x1x128xf32, #tpu.memory_space<vmem>>, %arg10: memref<2xf32, #tpu.memory_space<smem>>) attributes {dimension_semantics = [#tpu.dimension_semantics<arbitrary>, #tpu.dimension_semantics<arbitrary>, #tpu.dimension_semantics<arbitrary>], iteration_bounds = array<i64: 2, 2, 2>, scalar_prefetch = 0 : i64, scratch_operands = 4 : i64, tpu.core_type = #tpu.core_type<tc>, window_params = [{transform_indices = @transform_0, window_bounds = array<i64: 2>}, {transform_indices = @transform_1, window_bounds = array<i64: 1, 8, 128>}, {transform_indices = @transform_2, window_bounds = array<i64: 1, 8, 128>}, {pipeline_mode = #tpu.pipeline_mode<synchronous>, transform_indices = @transform_3, window_bounds = array<i64: 1, 1>}]} {
    %c1_i32 = arith.constant 1 : i32
    %0 = arith.cmpi eq, %arg1, %c1_i32 : i32
    %c1_i32_0 = arith.constant 1 : i32
    %1 = arith.cmpi eq, %arg2, %c1_i32_0 : i32
    %2 = arith.andi %0, %1 : i1
    %c0_i32 = arith.constant 0 : i32
    %3 = arith.cmpi eq, %arg0, %c0_i32 : i32
    %c0_i32_1 = arith.constant 0 : i32
    %4 = arith.cmpi eq, %arg1, %c0_i32_1 : i32
    %5 = arith.andi %3, %4 : i1
    %c0_i32_2 = arith.constant 0 : i32
    %6 = arith.cmpi eq, %arg2, %c0_i32_2 : i32
    %7 = arith.andi %5, %6 : i1
    %8 = arith.extui %7 : i1 to i32
    %c0_i32_3 = arith.constant 0 : i32
    %9 = arith.cmpi ne, %8, %c0_i32_3 : i32
    scf.if %9 {
      %cst = arith.constant 0.000000e+00 : f32
      %24 = vector.broadcast %cst : f32 to vector<21x8x128xf32>
      %c0 = arith.constant 0 : index
      %c0_12 = arith.constant 0 : index
      %c0_13 = arith.constant 0 : index
      %25 = vector.load %arg7[%c0, %c0_12, %c0_13] : memref<21x8x128xf32, #tpu.memory_space<vmem>>, vector<21x8x128xf32>
      tpu.vector_store %arg7[%c0, %c0_12, %c0_13], %24 {strides = array<i32>} : memref<21x8x128xf32, #tpu.memory_space<vmem>>, vector<21x8x128xf32>,
      %26 = tpu.iota {dimensions = array<i32: 0>} : vector<8x128xi32>
      %27 = tpu.iota {dimensions = array<i32: 1>} : vector<8x128xi32>
      %c0_i32_14 = arith.constant 0 : i32
      %28 = vector.broadcast %c0_i32_14 : i32 to vector<8x128xi32>
      %29 = arith.andi %26, %28 : vector<8x128xi32>
      %c0_i32_15 = arith.constant 0 : i32
      %30 = vector.broadcast %c0_i32_15 : i32 to vector<8x128xi32>
      %31 = arith.cmpi eq, %29, %30 : vector<8x128xi32>
      %c0_i32_16 = arith.constant 0 : i32
      %32 = vector.broadcast %c0_i32_16 : i32 to vector<8x128xi32>
      %33 = arith.andi %27, %32 : vector<8x128xi32>
      %c0_i32_17 = arith.constant 0 : i32
      %34 = vector.broadcast %c0_i32_17 : i32 to vector<8x128xi32>
      %35 = arith.cmpi eq, %33, %34 : vector<8x128xi32>
      %36 = arith.andi %31, %35 : vector<8x128xi1>
      %c127_i32 = arith.constant 127 : i32
      %37 = vector.broadcast %c127_i32 : i32 to vector<8x128xi32>
      %38 = arith.cmpi slt, %27, %37 : vector<8x128xi32>
      %39 = arith.andi %36, %38 : vector<8x128xi1>
      %40 = arith.extui %39 : vector<8x128xi1> to vector<8x128xi32>
      %41 = arith.sitofp %40 : vector<8x128xi32> to vector<8x128xf32>
      %c0_18 = arith.constant 0 : index
      %c0_19 = arith.constant 0 : index
      %c0_20 = arith.constant 0 : index
      %42 = vector.load %arg8[%c0_18, %c0_19, %c0_20] : memref<8x8x128xf32, #tpu.memory_space<vmem>>, vector<1x8x128xf32>
      %43 = vector.shape_cast %42 : vector<1x8x128xf32> to vector<8x128xf32>
      %44 = vector.shape_cast %41 : vector<8x128xf32> to vector<1x8x128xf32>
      tpu.vector_store %arg8[%c0_18, %c0_19, %c0_20], %44 {strides = array<i32>} : memref<8x8x128xf32, #tpu.memory_space<vmem>>, vector<1x8x128xf32>,
      %c7_i32 = arith.constant 7 : i32
      %45 = vector.broadcast %c7_i32 : i32 to vector<8x128xi32>
      %46 = arith.cmpi slt, %26, %45 : vector<8x128xi32>
      %47 = arith.andi %36, %46 : vector<8x128xi1>
      %48 = arith.extui %47 : vector<8x128xi1> to vector<8x128xi32>
      %49 = arith.sitofp %48 : vector<8x128xi32> to vector<8x128xf32>
      %c1 = arith.constant 1 : index
      %c0_21 = arith.constant 0 : index
      %c0_22 = arith.constant 0 : index
      %50 = vector.load %arg8[%c1, %c0_21, %c0_22] : memref<8x8x128xf32, #tpu.memory_space<vmem>>, vector<1x8x128xf32>
      %51 = vector.shape_cast %50 : vector<1x8x128xf32> to vector<8x128xf32>
      %52 = vector.shape_cast %49 : vector<8x128xf32> to vector<1x8x128xf32>
      tpu.vector_store %arg8[%c1, %c0_21, %c0_22], %52 {strides = array<i32>} : memref<8x8x128xf32, #tpu.memory_space<vmem>>, vector<1x8x128xf32>,
      %c1_i32_23 = arith.constant 1 : i32
      %53 = vector.broadcast %c1_i32_23 : i32 to vector<8x128xi32>
      %54 = arith.andi %26, %53 : vector<8x128xi32>
      %c0_i32_24 = arith.constant 0 : i32
      %55 = vector.broadcast %c0_i32_24 : i32 to vector<8x128xi32>
      %56 = arith.cmpi eq, %54, %55 : vector<8x128xi32>
      %c1_i32_25 = arith.constant 1 : i32
      %57 = vector.broadcast %c1_i32_25 : i32 to vector<8x128xi32>
      %58 = arith.andi %27, %57 : vector<8x128xi32>
      %c0_i32_26 = arith.constant 0 : i32
      %59 = vector.broadcast %c0_i32_26 : i32 to vector<8x128xi32>
      %60 = arith.cmpi eq, %58, %59 : vector<8x128xi32>
      %61 = arith.andi %56, %60 : vector<8x128xi1>
      %c126_i32 = arith.constant 126 : i32
      %62 = vector.broadcast %c126_i32 : i32 to vector<8x128xi32>
      %63 = arith.cmpi slt, %27, %62 : vector<8x128xi32>
      %64 = arith.andi %61, %63 : vector<8x128xi1>
      %65 = arith.extui %64 : vector<8x128xi1> to vector<8x128xi32>
      %66 = arith.sitofp %65 : vector<8x128xi32> to vector<8x128xf32>
      %c2 = arith.constant 2 : index
      %c0_27 = arith.constant 0 : index
      %c0_28 = arith.constant 0 : index
      %67 = vector.load %arg8[%c2, %c0_27, %c0_28] : memref<8x8x128xf32, #tpu.memory_space<vmem>>, vector<1x8x128xf32>
      %68 = vector.shape_cast %67 : vector<1x8x128xf32> to vector<8x128xf32>
      %69 = vector.shape_cast %66 : vector<8x128xf32> to vector<1x8x128xf32>
      tpu.vector_store %arg8[%c2, %c0_27, %c0_28], %69 {strides = array<i32>} : memref<8x8x128xf32, #tpu.memory_space<vmem>>, vector<1x8x128xf32>,
      %c6_i32 = arith.constant 6 : i32
      %70 = vector.broadcast %c6_i32 : i32 to vector<8x128xi32>
      %71 = arith.cmpi slt, %26, %70 : vector<8x128xi32>
      %72 = arith.andi %61, %71 : vector<8x128xi1>
      %73 = arith.extui %72 : vector<8x128xi1> to vector<8x128xi32>
      %74 = arith.sitofp %73 : vector<8x128xi32> to vector<8x128xf32>
      %c3 = arith.constant 3 : index
      %c0_29 = arith.constant 0 : index
      %c0_30 = arith.constant 0 : index
      %75 = vector.load %arg8[%c3, %c0_29, %c0_30] : memref<8x8x128xf32, #tpu.memory_space<vmem>>, vector<1x8x128xf32>
      %76 = vector.shape_cast %75 : vector<1x8x128xf32> to vector<8x128xf32>
      %77 = vector.shape_cast %74 : vector<8x128xf32> to vector<1x8x128xf32>
      tpu.vector_store %arg8[%c3, %c0_29, %c0_30], %77 {strides = array<i32>} : memref<8x8x128xf32, #tpu.memory_space<vmem>>, vector<1x8x128xf32>,
      %c3_i32 = arith.constant 3 : i32
      %78 = vector.broadcast %c3_i32 : i32 to vector<8x128xi32>
      %79 = arith.andi %26, %78 : vector<8x128xi32>
      %c0_i32_31 = arith.constant 0 : i32
      %80 = vector.broadcast %c0_i32_31 : i32 to vector<8x128xi32>
      %81 = arith.cmpi eq, %79, %80 : vector<8x128xi32>
      %c3_i32_32 = arith.constant 3 : i32
      %82 = vector.broadcast %c3_i32_32 : i32 to vector<8x128xi32>
      %83 = arith.andi %27, %82 : vector<8x128xi32>
      %c0_i32_33 = arith.constant 0 : i32
      %84 = vector.broadcast %c0_i32_33 : i32 to vector<8x128xi32>
      %85 = arith.cmpi eq, %83, %84 : vector<8x128xi32>
      %86 = arith.andi %81, %85 : vector<8x128xi1>
      %c124_i32 = arith.constant 124 : i32
      %87 = vector.broadcast %c124_i32 : i32 to vector<8x128xi32>
      %88 = arith.cmpi slt, %27, %87 : vector<8x128xi32>
      %89 = arith.andi %86, %88 : vector<8x128xi1>
      %90 = arith.extui %89 : vector<8x128xi1> to vector<8x128xi32>
      %91 = arith.sitofp %90 : vector<8x128xi32> to vector<8x128xf32>
      %c4 = arith.constant 4 : index
      %c0_34 = arith.constant 0 : index
      %c0_35 = arith.constant 0 : index
      %92 = vector.load %arg8[%c4, %c0_34, %c0_35] : memref<8x8x128xf32, #tpu.memory_space<vmem>>, vector<1x8x128xf32>
      %93 = vector.shape_cast %92 : vector<1x8x128xf32> to vector<8x128xf32>
      %94 = vector.shape_cast %91 : vector<8x128xf32> to vector<1x8x128xf32>
      tpu.vector_store %arg8[%c4, %c0_34, %c0_35], %94 {strides = array<i32>} : memref<8x8x128xf32, #tpu.memory_space<vmem>>, vector<1x8x128xf32>,
      %c4_i32 = arith.constant 4 : i32
      %95 = vector.broadcast %c4_i32 : i32 to vector<8x128xi32>
      %96 = arith.cmpi slt, %26, %95 : vector<8x128xi32>
      %97 = arith.andi %86, %96 : vector<8x128xi1>
      %98 = arith.extui %97 : vector<8x128xi1> to vector<8x128xi32>
      %99 = arith.sitofp %98 : vector<8x128xi32> to vector<8x128xf32>
      %c5 = arith.constant 5 : index
      %c0_36 = arith.constant 0 : index
      %c0_37 = arith.constant 0 : index
      %100 = vector.load %arg8[%c5, %c0_36, %c0_37] : memref<8x8x128xf32, #tpu.memory_space<vmem>>, vector<1x8x128xf32>
      %101 = vector.shape_cast %100 : vector<1x8x128xf32> to vector<8x128xf32>
      %102 = vector.shape_cast %99 : vector<8x128xf32> to vector<1x8x128xf32>
      tpu.vector_store %arg8[%c5, %c0_36, %c0_37], %102 {strides = array<i32>} : memref<8x8x128xf32, #tpu.memory_space<vmem>>, vector<1x8x128xf32>,
      %c7_i32_38 = arith.constant 7 : i32
      %103 = vector.broadcast %c7_i32_38 : i32 to vector<8x128xi32>
      %104 = arith.andi %26, %103 : vector<8x128xi32>
      %c0_i32_39 = arith.constant 0 : i32
      %105 = vector.broadcast %c0_i32_39 : i32 to vector<8x128xi32>
      %106 = arith.cmpi eq, %104, %105 : vector<8x128xi32>
      %c7_i32_40 = arith.constant 7 : i32
      %107 = vector.broadcast %c7_i32_40 : i32 to vector<8x128xi32>
      %108 = arith.andi %27, %107 : vector<8x128xi32>
      %c0_i32_41 = arith.constant 0 : i32
      %109 = vector.broadcast %c0_i32_41 : i32 to vector<8x128xi32>
      %110 = arith.cmpi eq, %108, %109 : vector<8x128xi32>
      %111 = arith.andi %106, %110 : vector<8x128xi1>
      %c120_i32 = arith.constant 120 : i32
      %112 = vector.broadcast %c120_i32 : i32 to vector<8x128xi32>
      %113 = arith.cmpi slt, %27, %112 : vector<8x128xi32>
      %114 = arith.andi %111, %113 : vector<8x128xi1>
      %115 = arith.extui %114 : vector<8x128xi1> to vector<8x128xi32>
      %116 = arith.sitofp %115 : vector<8x128xi32> to vector<8x128xf32>
      %c6 = arith.constant 6 : index
      %c0_42 = arith.constant 0 : index
      %c0_43 = arith.constant 0 : index
      %117 = vector.load %arg8[%c6, %c0_42, %c0_43] : memref<8x8x128xf32, #tpu.memory_space<vmem>>, vector<1x8x128xf32>
      %118 = vector.shape_cast %117 : vector<1x8x128xf32> to vector<8x128xf32>
      %119 = vector.shape_cast %116 : vector<8x128xf32> to vector<1x8x128xf32>
      tpu.vector_store %arg8[%c6, %c0_42, %c0_43], %119 {strides = array<i32>} : memref<8x8x128xf32, #tpu.memory_space<vmem>>, vector<1x8x128xf32>,
      %c0_i32_44 = arith.constant 0 : i32
      %120 = vector.broadcast %c0_i32_44 : i32 to vector<8x128xi32>
      %121 = arith.cmpi slt, %26, %120 : vector<8x128xi32>
      %122 = arith.andi %111, %121 : vector<8x128xi1>
      %123 = arith.extui %122 : vector<8x128xi1> to vector<8x128xi32>
      %124 = arith.sitofp %123 : vector<8x128xi32> to vector<8x128xf32>
      %c7 = arith.constant 7 : index
      %c0_45 = arith.constant 0 : index
      %c0_46 = arith.constant 0 : index
      %125 = vector.load %arg8[%c7, %c0_45, %c0_46] : memref<8x8x128xf32, #tpu.memory_space<vmem>>, vector<1x8x128xf32>
      %126 = vector.shape_cast %125 : vector<1x8x128xf32> to vector<8x128xf32>
      %127 = vector.shape_cast %124 : vector<8x128xf32> to vector<1x8x128xf32>
      tpu.vector_store %arg8[%c7, %c0_45, %c0_46], %127 {strides = array<i32>} : memref<8x8x128xf32, #tpu.memory_space<vmem>>, vector<1x8x128xf32>,
    } else {
    }
    %c0_i32_4 = arith.constant 0 : i32
    %10 = arith.cmpi eq, %arg0, %c0_i32_4 : i32
    %11 = arith.extui %10 : i1 to i32
    %c0_i32_5 = arith.constant 0 : i32
    %12 = arith.cmpi ne, %11, %c0_i32_5 : i32
    scf.if %12 {
      %c0 = arith.constant 0 : index
      %c0_12 = arith.constant 0 : index
      %c0_13 = arith.constant 0 : index
      %24 = vector.load %arg4[%c0, %c0_12, %c0_13] : memref<1x8x128xf32, #tpu.memory_space<vmem>>, vector<1x8x128xf32>
      %25 = vector.shape_cast %24 : vector<1x8x128xf32> to vector<8x128xf32>
      %c0_14 = arith.constant 0 : index
      %c0_15 = arith.constant 0 : index
      %c0_16 = arith.constant 0 : index
      %26 = vector.load %arg5[%c0_14, %c0_15, %c0_16] : memref<1x8x128xf32, #tpu.memory_space<vmem>>, vector<1x8x128xf32>
      %27 = vector.shape_cast %26 : vector<1x8x128xf32> to vector<8x128xf32>
      %c0_17 = arith.constant 0 : index
      %28 = memref.load %arg3[%c0_17] : memref<2xf32, #tpu.memory_space<smem>>
      %c1 = arith.constant 1 : index
      %29 = memref.load %arg3[%c1] : memref<2xf32, #tpu.memory_space<smem>>
      %30 = arith.cmpf one, %25, %25 : vector<8x128xf32>
      %cst = arith.constant dense<true> : vector<8x128xi1>
      %31 = arith.xori %30, %cst : vector<8x128xi1>
      %32 = arith.cmpf one, %27, %27 : vector<8x128xf32>
      %cst_18 = arith.constant dense<true> : vector<8x128xi1>
      %33 = arith.xori %32, %cst_18 : vector<8x128xi1>
      %c0_19 = arith.constant 0 : index
      %c0_20 = arith.constant 0 : index
      %c0_21 = arith.constant 0 : index
      %34 = vector.load %arg7[%c0_19, %c0_20, %c0_21] : memref<21x8x128xf32, #tpu.memory_space<vmem>>, vector<1x8x128xf32>
      %35 = vector.shape_cast %34 : vector<1x8x128xf32> to vector<8x128xf32>
      %36 = vector.broadcast %28 : f32 to vector<8x128xf32>
      %37 = arith.subf %25, %36 : vector<8x128xf32>
      %38 = math.absf %37 : vector<8x128xf32>
      %cst_22 = arith.constant 0.000000e+00 : f32
      %39 = vector.broadcast %cst_22 : f32 to vector<8x128xf32>
      %40 = arith.select %31, %38, %39 : vector<8x128xi1>, vector<8x128xf32>
      %41 = arith.addf %35, %40 : vector<8x128xf32>
      %c0_23 = arith.constant 0 : index
      %c0_24 = arith.constant 0 : index
      %c0_25 = arith.constant 0 : index
      %42 = vector.load %arg7[%c0_23, %c0_24, %c0_25] : memref<21x8x128xf32, #tpu.memory_space<vmem>>, vector<1x8x128xf32>
      %43 = vector.shape_cast %42 : vector<1x8x128xf32> to vector<8x128xf32>
      %44 = vector.shape_cast %41 : vector<8x128xf32> to vector<1x8x128xf32>
      tpu.vector_store %arg7[%c0_23, %c0_24, %c0_25], %44 {strides = array<i32>} : memref<21x8x128xf32, #tpu.memory_space<vmem>>, vector<1x8x128xf32>,
      %c1_26 = arith.constant 1 : index
      %c0_27 = arith.constant 0 : index
      %c0_28 = arith.constant 0 : index
      %45 = vector.load %arg7[%c1_26, %c0_27, %c0_28] : memref<21x8x128xf32, #tpu.memory_space<vmem>>, vector<1x8x128xf32>
      %46 = vector.shape_cast %45 : vector<1x8x128xf32> to vector<8x128xf32>
      %47 = arith.extui %31 : vector<8x128xi1> to vector<8x128xi32>
      %48 = arith.sitofp %47 : vector<8x128xi32> to vector<8x128xf32>
      %49 = arith.addf %46, %48 : vector<8x128xf32>
      %c1_29 = arith.constant 1 : index
      %c0_30 = arith.constant 0 : index
      %c0_31 = arith.constant 0 : index
      %50 = vector.load %arg7[%c1_29, %c0_30, %c0_31] : memref<21x8x128xf32, #tpu.memory_space<vmem>>, vector<1x8x128xf32>
      %51 = vector.shape_cast %50 : vector<1x8x128xf32> to vector<8x128xf32>
      %52 = vector.shape_cast %49 : vector<8x128xf32> to vector<1x8x128xf32>
      tpu.vector_store %arg7[%c1_29, %c0_30, %c0_31], %52 {strides = array<i32>} : memref<21x8x128xf32, #tpu.memory_space<vmem>>, vector<1x8x128xf32>,
      %c2 = arith.constant 2 : index
      %c0_32 = arith.constant 0 : index
      %c0_33 = arith.constant 0 : index
      %53 = vector.load %arg7[%c2, %c0_32, %c0_33] : memref<21x8x128xf32, #tpu.memory_space<vmem>>, vector<1x8x128xf32>
      %54 = vector.shape_cast %53 : vector<1x8x128xf32> to vector<8x128xf32>
      %55 = vector.broadcast %29 : f32 to vector<8x128xf32>
      %56 = arith.subf %27, %55 : vector<8x128xf32>
      %57 = math.absf %56 : vector<8x128xf32>
      %cst_34 = arith.constant 0.000000e+00 : f32
      %58 = vector.broadcast %cst_34 : f32 to vector<8x128xf32>
      %59 = arith.select %33, %57, %58 : vector<8x128xi1>, vector<8x128xf32>
      %60 = arith.addf %54, %59 : vector<8x128xf32>
      %c2_35 = arith.constant 2 : index
      %c0_36 = arith.constant 0 : index
      %c0_37 = arith.constant 0 : index
      %61 = vector.load %arg7[%c2_35, %c0_36, %c0_37] : memref<21x8x128xf32, #tpu.memory_space<vmem>>, vector<1x8x128xf32>
      %62 = vector.shape_cast %61 : vector<1x8x128xf32> to vector<8x128xf32>
      %63 = vector.shape_cast %60 : vector<8x128xf32> to vector<1x8x128xf32>
      tpu.vector_store %arg7[%c2_35, %c0_36, %c0_37], %63 {strides = array<i32>} : memref<21x8x128xf32, #tpu.memory_space<vmem>>, vector<1x8x128xf32>,
      %c3 = arith.constant 3 : index
      %c0_38 = arith.constant 0 : index
      %c0_39 = arith.constant 0 : index
      %64 = vector.load %arg7[%c3, %c0_38, %c0_39] : memref<21x8x128xf32, #tpu.memory_space<vmem>>, vector<1x8x128xf32>
      %65 = vector.shape_cast %64 : vector<1x8x128xf32> to vector<8x128xf32>
      %66 = arith.extui %33 : vector<8x128xi1> to vector<8x128xi32>
      %67 = arith.sitofp %66 : vector<8x128xi32> to vector<8x128xf32>
      %68 = arith.addf %65, %67 : vector<8x128xf32>
      %c3_40 = arith.constant 3 : index
      %c0_41 = arith.constant 0 : index
      %c0_42 = arith.constant 0 : index
      %69 = vector.load %arg7[%c3_40, %c0_41, %c0_42] : memref<21x8x128xf32, #tpu.memory_space<vmem>>, vector<1x8x128xf32>
      %70 = vector.shape_cast %69 : vector<1x8x128xf32> to vector<8x128xf32>
      %71 = vector.shape_cast %68 : vector<8x128xf32> to vector<1x8x128xf32>
      tpu.vector_store %arg7[%c3_40, %c0_41, %c0_42], %71 {strides = array<i32>} : memref<21x8x128xf32, #tpu.memory_space<vmem>>, vector<1x8x128xf32>,
      %72 = arith.subf %27, %25 : vector<8x128xf32>
      %73 = tpu.weird %25 : vector<8x128xf32> -> vector<8x128xi1>
      %cst_43 = arith.constant dense<true> : vector<8x128xi1>
      %74 = arith.xori %73, %cst_43 : vector<8x128xi1>
      %75 = arith.extui %74 : vector<8x128xi1> to vector<8x128xi32>
      %76 = arith.sitofp %75 : vector<8x128xi32> to vector<8x128xf32>
      %c0_i32_44 = arith.constant 0 : i32
      %77 = arith.cmpi sgt, %arg2, %c0_i32_44 : i32
      %78 = arith.extui %77 : i1 to i32
      %c0_i32_45 = arith.constant 0 : i32
      %79 = arith.cmpi ne, %78, %c0_i32_45 : i32
      scf.if %79 {
        %280 = tpu.iota {dimensions = array<i32: 1>} : vector<1x128xi32>
        %281 = vector.extract_strided_slice %72 {offsets = [0, 0], sizes = [1, 128], strides = [1, 1]} : vector<8x128xf32> to vector<1x128xf32>
        %282 = vector.extract_strided_slice %76 {offsets = [0, 0], sizes = [1, 128], strides = [1, 1]} : vector<8x128xf32> to vector<1x128xf32>
        %c0_181 = arith.constant 0 : index
        %c0_182 = arith.constant 0 : index
        %c0_183 = arith.constant 0 : index
        %283 = vector.load %arg9[%c0_181, %c0_182, %c0_183] : memref<8x1x128xf32, #tpu.memory_space<vmem>>, vector<1x1x128xf32>
        %284 = vector.shape_cast %283 : vector<1x1x128xf32> to vector<1x128xf32>
        %285 = arith.subf %281, %284 : vector<1x128xf32>
        %c1_184 = arith.constant 1 : index
        %c0_185 = arith.constant 0 : index
        %c0_186 = arith.constant 0 : index
        %286 = vector.load %arg9[%c1_184, %c0_185, %c0_186] : memref<8x1x128xf32, #tpu.memory_space<vmem>>, vector<1x1x128xf32>
        %287 = vector.shape_cast %286 : vector<1x1x128xf32> to vector<1x128xf32>
        %288 = arith.mulf %282, %287 : vector<1x128xf32>
        %c7_187 = arith.constant 7 : index
        %c0_188 = arith.constant 0 : index
        %c0_189 = arith.constant 0 : index
        %289 = vector.load %arg7[%c7_187, %c0_188, %c0_189] : memref<21x8x128xf32, #tpu.memory_space<vmem>>, vector<1x1x128xf32>
        %290 = vector.shape_cast %289 : vector<1x1x128xf32> to vector<1x128xf32>
        %cst_190 = arith.constant 0.000000e+00 : f32
        %291 = vector.broadcast %cst_190 : f32 to vector<1x128xf32>
        %292 = arith.cmpf ogt, %288, %291 : vector<1x128xf32>
        %293 = math.absf %285 : vector<1x128xf32>
        %cst_191 = arith.constant 0.000000e+00 : f32
        %294 = vector.broadcast %cst_191 : f32 to vector<1x128xf32>
        %295 = arith.select %292, %293, %294 : vector<1x128xi1>, vector<1x128xf32>
        %296 = arith.addf %290, %295 : vector<1x128xf32>
        %c7_192 = arith.constant 7 : index
        %c0_193 = arith.constant 0 : index
        %c0_194 = arith.constant 0 : index
        %297 = vector.load %arg7[%c7_192, %c0_193, %c0_194] : memref<21x8x128xf32, #tpu.memory_space<vmem>>, vector<1x1x128xf32>
        %298 = vector.shape_cast %297 : vector<1x1x128xf32> to vector<1x128xf32>
        %299 = vector.shape_cast %296 : vector<1x128xf32> to vector<1x1x128xf32>
        tpu.vector_store %arg7[%c7_192, %c0_193, %c0_194], %299 {strides = array<i32>} : memref<21x8x128xf32, #tpu.memory_space<vmem>>, vector<1x1x128xf32>,
        %c8_195 = arith.constant 8 : index
        %c0_196 = arith.constant 0 : index
        %c0_197 = arith.constant 0 : index
        %300 = vector.load %arg7[%c8_195, %c0_196, %c0_197] : memref<21x8x128xf32, #tpu.memory_space<vmem>>, vector<1x1x128xf32>
        %301 = vector.shape_cast %300 : vector<1x1x128xf32> to vector<1x128xf32>
        %302 = arith.addf %301, %288 : vector<1x128xf32>
        %c8_198 = arith.constant 8 : index
        %c0_199 = arith.constant 0 : index
        %c0_200 = arith.constant 0 : index
        %303 = vector.load %arg7[%c8_198, %c0_199, %c0_200] : memref<21x8x128xf32, #tpu.memory_space<vmem>>, vector<1x1x128xf32>
        %304 = vector.shape_cast %303 : vector<1x1x128xf32> to vector<1x128xf32>
        %305 = vector.shape_cast %302 : vector<1x128xf32> to vector<1x1x128xf32>
        tpu.vector_store %arg7[%c8_198, %c0_199, %c0_200], %305 {strides = array<i32>} : memref<21x8x128xf32, #tpu.memory_space<vmem>>, vector<1x1x128xf32>,
        %c2_201 = arith.constant 2 : index
        %c0_202 = arith.constant 0 : index
        %c0_203 = arith.constant 0 : index
        %306 = vector.load %arg9[%c2_201, %c0_202, %c0_203] : memref<8x1x128xf32, #tpu.memory_space<vmem>>, vector<1x1x128xf32>
        %307 = vector.shape_cast %306 : vector<1x1x128xf32> to vector<1x128xf32>
        %308 = arith.subf %281, %307 : vector<1x128xf32>
        %c3_204 = arith.constant 3 : index
        %c0_205 = arith.constant 0 : index
        %c0_206 = arith.constant 0 : index
        %309 = vector.load %arg9[%c3_204, %c0_205, %c0_206] : memref<8x1x128xf32, #tpu.memory_space<vmem>>, vector<1x1x128xf32>
        %310 = vector.shape_cast %309 : vector<1x1x128xf32> to vector<1x128xf32>
        %311 = arith.mulf %282, %310 : vector<1x128xf32>
        %c1_i32_207 = arith.constant 1 : i32
        %312 = vector.broadcast %c1_i32_207 : i32 to vector<1x128xi32>
        %313 = arith.andi %280, %312 : vector<1x128xi32>
        %c0_i32_208 = arith.constant 0 : i32
        %314 = vector.broadcast %c0_i32_208 : i32 to vector<1x128xi32>
        %315 = arith.cmpi eq, %313, %314 : vector<1x128xi32>
        %316 = arith.extui %315 : vector<1x128xi1> to vector<1x128xi32>
        %317 = arith.sitofp %316 : vector<1x128xi32> to vector<1x128xf32>
        %318 = arith.mulf %311, %317 : vector<1x128xf32>
        %c11_209 = arith.constant 11 : index
        %c0_210 = arith.constant 0 : index
        %c0_211 = arith.constant 0 : index
        %319 = vector.load %arg7[%c11_209, %c0_210, %c0_211] : memref<21x8x128xf32, #tpu.memory_space<vmem>>, vector<1x1x128xf32>
        %320 = vector.shape_cast %319 : vector<1x1x128xf32> to vector<1x128xf32>
        %cst_212 = arith.constant 0.000000e+00 : f32
        %321 = vector.broadcast %cst_212 : f32 to vector<1x128xf32>
        %322 = arith.cmpf ogt, %318, %321 : vector<1x128xf32>
        %323 = math.absf %308 : vector<1x128xf32>
        %cst_213 = arith.constant 0.000000e+00 : f32
        %324 = vector.broadcast %cst_213 : f32 to vector<1x128xf32>
        %325 = arith.select %322, %323, %324 : vector<1x128xi1>, vector<1x128xf32>
        %326 = arith.addf %320, %325 : vector<1x128xf32>
        %c11_214 = arith.constant 11 : index
        %c0_215 = arith.constant 0 : index
        %c0_216 = arith.constant 0 : index
        %327 = vector.load %arg7[%c11_214, %c0_215, %c0_216] : memref<21x8x128xf32, #tpu.memory_space<vmem>>, vector<1x1x128xf32>
        %328 = vector.shape_cast %327 : vector<1x1x128xf32> to vector<1x128xf32>
        %329 = vector.shape_cast %326 : vector<1x128xf32> to vector<1x1x128xf32>
        tpu.vector_store %arg7[%c11_214, %c0_215, %c0_216], %329 {strides = array<i32>} : memref<21x8x128xf32, #tpu.memory_space<vmem>>, vector<1x1x128xf32>,
        %c12_217 = arith.constant 12 : index
        %c0_218 = arith.constant 0 : index
        %c0_219 = arith.constant 0 : index
        %330 = vector.load %arg7[%c12_217, %c0_218, %c0_219] : memref<21x8x128xf32, #tpu.memory_space<vmem>>, vector<1x1x128xf32>
        %331 = vector.shape_cast %330 : vector<1x1x128xf32> to vector<1x128xf32>
        %332 = arith.addf %331, %318 : vector<1x128xf32>
        %c12_220 = arith.constant 12 : index
        %c0_221 = arith.constant 0 : index
        %c0_222 = arith.constant 0 : index
        %333 = vector.load %arg7[%c12_220, %c0_221, %c0_222] : memref<21x8x128xf32, #tpu.memory_space<vmem>>, vector<1x1x128xf32>
        %334 = vector.shape_cast %333 : vector<1x1x128xf32> to vector<1x128xf32>
        %335 = vector.shape_cast %332 : vector<1x128xf32> to vector<1x1x128xf32>
        tpu.vector_store %arg7[%c12_220, %c0_221, %c0_222], %335 {strides = array<i32>} : memref<21x8x128xf32, #tpu.memory_space<vmem>>, vector<1x1x128xf32>,
        %c4_223 = arith.constant 4 : index
        %c0_224 = arith.constant 0 : index
        %c0_225 = arith.constant 0 : index
        %336 = vector.load %arg9[%c4_223, %c0_224, %c0_225] : memref<8x1x128xf32, #tpu.memory_space<vmem>>, vector<1x1x128xf32>
        %337 = vector.shape_cast %336 : vector<1x1x128xf32> to vector<1x128xf32>
        %338 = arith.subf %281, %337 : vector<1x128xf32>
        %c5_226 = arith.constant 5 : index
        %c0_227 = arith.constant 0 : index
        %c0_228 = arith.constant 0 : index
        %339 = vector.load %arg9[%c5_226, %c0_227, %c0_228] : memref<8x1x128xf32, #tpu.memory_space<vmem>>, vector<1x1x128xf32>
        %340 = vector.shape_cast %339 : vector<1x1x128xf32> to vector<1x128xf32>
        %341 = arith.mulf %282, %340 : vector<1x128xf32>
        %c3_i32 = arith.constant 3 : i32
        %342 = vector.broadcast %c3_i32 : i32 to vector<1x128xi32>
        %343 = arith.andi %280, %342 : vector<1x128xi32>
        %c0_i32_229 = arith.constant 0 : i32
        %344 = vector.broadcast %c0_i32_229 : i32 to vector<1x128xi32>
        %345 = arith.cmpi eq, %343, %344 : vector<1x128xi32>
        %346 = arith.extui %345 : vector<1x128xi1> to vector<1x128xi32>
        %347 = arith.sitofp %346 : vector<1x128xi32> to vector<1x128xf32>
        %348 = arith.mulf %341, %347 : vector<1x128xf32>
        %c15_230 = arith.constant 15 : index
        %c0_231 = arith.constant 0 : index
        %c0_232 = arith.constant 0 : index
        %349 = vector.load %arg7[%c15_230, %c0_231, %c0_232] : memref<21x8x128xf32, #tpu.memory_space<vmem>>, vector<1x1x128xf32>
        %350 = vector.shape_cast %349 : vector<1x1x128xf32> to vector<1x128xf32>
        %cst_233 = arith.constant 0.000000e+00 : f32
        %351 = vector.broadcast %cst_233 : f32 to vector<1x128xf32>
        %352 = arith.cmpf ogt, %348, %351 : vector<1x128xf32>
        %353 = math.absf %338 : vector<1x128xf32>
        %cst_234 = arith.constant 0.000000e+00 : f32
        %354 = vector.broadcast %cst_234 : f32 to vector<1x128xf32>
        %355 = arith.select %352, %353, %354 : vector<1x128xi1>, vector<1x128xf32>
        %356 = arith.addf %350, %355 : vector<1x128xf32>
        %c15_235 = arith.constant 15 : index
        %c0_236 = arith.constant 0 : index
        %c0_237 = arith.constant 0 : index
        %357 = vector.load %arg7[%c15_235, %c0_236, %c0_237] : memref<21x8x128xf32, #tpu.memory_space<vmem>>, vector<1x1x128xf32>
        %358 = vector.shape_cast %357 : vector<1x1x128xf32> to vector<1x128xf32>
        %359 = vector.shape_cast %356 : vector<1x128xf32> to vector<1x1x128xf32>
        tpu.vector_store %arg7[%c15_235, %c0_236, %c0_237], %359 {strides = array<i32>} : memref<21x8x128xf32, #tpu.memory_space<vmem>>, vector<1x1x128xf32>,
        %c16_238 = arith.constant 16 : index
        %c0_239 = arith.constant 0 : index
        %c0_240 = arith.constant 0 : index
        %360 = vector.load %arg7[%c16_238, %c0_239, %c0_240] : memref<21x8x128xf32, #tpu.memory_space<vmem>>, vector<1x1x128xf32>
        %361 = vector.shape_cast %360 : vector<1x1x128xf32> to vector<1x128xf32>
        %362 = arith.addf %361, %348 : vector<1x128xf32>
        %c16_241 = arith.constant 16 : index
        %c0_242 = arith.constant 0 : index
        %c0_243 = arith.constant 0 : index
        %363 = vector.load %arg7[%c16_241, %c0_242, %c0_243] : memref<21x8x128xf32, #tpu.memory_space<vmem>>, vector<1x1x128xf32>
        %364 = vector.shape_cast %363 : vector<1x1x128xf32> to vector<1x128xf32>
        %365 = vector.shape_cast %362 : vector<1x128xf32> to vector<1x1x128xf32>
        tpu.vector_store %arg7[%c16_241, %c0_242, %c0_243], %365 {strides = array<i32>} : memref<21x8x128xf32, #tpu.memory_space<vmem>>, vector<1x1x128xf32>,
        %c6_244 = arith.constant 6 : index
        %c0_245 = arith.constant 0 : index
        %c0_246 = arith.constant 0 : index
        %366 = vector.load %arg9[%c6_244, %c0_245, %c0_246] : memref<8x1x128xf32, #tpu.memory_space<vmem>>, vector<1x1x128xf32>
        %367 = vector.shape_cast %366 : vector<1x1x128xf32> to vector<1x128xf32>
        %368 = arith.subf %281, %367 : vector<1x128xf32>
        %c7_247 = arith.constant 7 : index
        %c0_248 = arith.constant 0 : index
        %c0_249 = arith.constant 0 : index
        %369 = vector.load %arg9[%c7_247, %c0_248, %c0_249] : memref<8x1x128xf32, #tpu.memory_space<vmem>>, vector<1x1x128xf32>
        %370 = vector.shape_cast %369 : vector<1x1x128xf32> to vector<1x128xf32>
        %371 = arith.mulf %282, %370 : vector<1x128xf32>
        %c7_i32_250 = arith.constant 7 : i32
        %372 = vector.broadcast %c7_i32_250 : i32 to vector<1x128xi32>
        %373 = arith.andi %280, %372 : vector<1x128xi32>
        %c0_i32_251 = arith.constant 0 : i32
        %374 = vector.broadcast %c0_i32_251 : i32 to vector<1x128xi32>
        %375 = arith.cmpi eq, %373, %374 : vector<1x128xi32>
        %376 = arith.extui %375 : vector<1x128xi1> to vector<1x128xi32>
        %377 = arith.sitofp %376 : vector<1x128xi32> to vector<1x128xf32>
        %378 = arith.mulf %371, %377 : vector<1x128xf32>
        %c19 = arith.constant 19 : index
        %c0_252 = arith.constant 0 : index
        %c0_253 = arith.constant 0 : index
        %379 = vector.load %arg7[%c19, %c0_252, %c0_253] : memref<21x8x128xf32, #tpu.memory_space<vmem>>, vector<1x1x128xf32>
        %380 = vector.shape_cast %379 : vector<1x1x128xf32> to vector<1x128xf32>
        %cst_254 = arith.constant 0.000000e+00 : f32
        %381 = vector.broadcast %cst_254 : f32 to vector<1x128xf32>
        %382 = arith.cmpf ogt, %378, %381 : vector<1x128xf32>
        %383 = math.absf %368 : vector<1x128xf32>
        %cst_255 = arith.constant 0.000000e+00 : f32
        %384 = vector.broadcast %cst_255 : f32 to vector<1x128xf32>
        %385 = arith.select %382, %383, %384 : vector<1x128xi1>, vector<1x128xf32>
        %386 = arith.addf %380, %385 : vector<1x128xf32>
        %c19_256 = arith.constant 19 : index
        %c0_257 = arith.constant 0 : index
        %c0_258 = arith.constant 0 : index
        %387 = vector.load %arg7[%c19_256, %c0_257, %c0_258] : memref<21x8x128xf32, #tpu.memory_space<vmem>>, vector<1x1x128xf32>
        %388 = vector.shape_cast %387 : vector<1x1x128xf32> to vector<1x128xf32>
        %389 = vector.shape_cast %386 : vector<1x128xf32> to vector<1x1x128xf32>
        tpu.vector_store %arg7[%c19_256, %c0_257, %c0_258], %389 {strides = array<i32>} : memref<21x8x128xf32, #tpu.memory_space<vmem>>, vector<1x1x128xf32>,
        %c20 = arith.constant 20 : index
        %c0_259 = arith.constant 0 : index
        %c0_260 = arith.constant 0 : index
        %390 = vector.load %arg7[%c20, %c0_259, %c0_260] : memref<21x8x128xf32, #tpu.memory_space<vmem>>, vector<1x1x128xf32>
        %391 = vector.shape_cast %390 : vector<1x1x128xf32> to vector<1x128xf32>
        %392 = arith.addf %391, %378 : vector<1x128xf32>
        %c20_261 = arith.constant 20 : index
        %c0_262 = arith.constant 0 : index
        %c0_263 = arith.constant 0 : index
        %393 = vector.load %arg7[%c20_261, %c0_262, %c0_263] : memref<21x8x128xf32, #tpu.memory_space<vmem>>, vector<1x1x128xf32>
        %394 = vector.shape_cast %393 : vector<1x1x128xf32> to vector<1x128xf32>
        %395 = vector.shape_cast %392 : vector<1x128xf32> to vector<1x1x128xf32>
        tpu.vector_store %arg7[%c20_261, %c0_262, %c0_263], %395 {strides = array<i32>} : memref<21x8x128xf32, #tpu.memory_space<vmem>>, vector<1x1x128xf32>,
      } else {
      }
      %c127_i32 = arith.constant 127 : i32
      %80 = tpu.dynamic_rotate %72 by %c127_i32 dim 1 : vector<8x128xf32>, i32 -> vector<8x128xf32>
      %81 = arith.subf %80, %72 : vector<8x128xf32>
      %c127_i32_46 = arith.constant 127 : i32
      %82 = tpu.dynamic_rotate %76 by %c127_i32_46 dim 1 : vector<8x128xf32>, i32 -> vector<8x128xf32>
      %83 = arith.mulf %82, %76 : vector<8x128xf32>
      %c0_47 = arith.constant 0 : index
      %c0_48 = arith.constant 0 : index
      %c0_49 = arith.constant 0 : index
      %84 = vector.load %arg8[%c0_47, %c0_48, %c0_49] : memref<8x8x128xf32, #tpu.memory_space<vmem>>, vector<1x8x128xf32>
      %85 = vector.shape_cast %84 : vector<1x8x128xf32> to vector<8x128xf32>
      %86 = arith.mulf %83, %85 : vector<8x128xf32>
      %c5 = arith.constant 5 : index
      %c0_50 = arith.constant 0 : index
      %c0_51 = arith.constant 0 : index
      %87 = vector.load %arg7[%c5, %c0_50, %c0_51] : memref<21x8x128xf32, #tpu.memory_space<vmem>>, vector<1x8x128xf32>
      %88 = vector.shape_cast %87 : vector<1x8x128xf32> to vector<8x128xf32>
      %cst_52 = arith.constant 0.000000e+00 : f32
      %89 = vector.broadcast %cst_52 : f32 to vector<8x128xf32>
      %90 = arith.cmpf ogt, %86, %89 : vector<8x128xf32>
      %91 = math.absf %81 : vector<8x128xf32>
      %cst_53 = arith.constant 0.000000e+00 : f32
      %92 = vector.broadcast %cst_53 : f32 to vector<8x128xf32>
      %93 = arith.select %90, %91, %92 : vector<8x128xi1>, vector<8x128xf32>
      %94 = arith.addf %88, %93 : vector<8x128xf32>
      %c5_54 = arith.constant 5 : index
      %c0_55 = arith.constant 0 : index
      %c0_56 = arith.constant 0 : index
      %95 = vector.load %arg7[%c5_54, %c0_55, %c0_56] : memref<21x8x128xf32, #tpu.memory_space<vmem>>, vector<1x8x128xf32>
      %96 = vector.shape_cast %95 : vector<1x8x128xf32> to vector<8x128xf32>
      %97 = vector.shape_cast %94 : vector<8x128xf32> to vector<1x8x128xf32>
      tpu.vector_store %arg7[%c5_54, %c0_55, %c0_56], %97 {strides = array<i32>} : memref<21x8x128xf32, #tpu.memory_space<vmem>>, vector<1x8x128xf32>,
      %c6 = arith.constant 6 : index
      %c0_57 = arith.constant 0 : index
      %c0_58 = arith.constant 0 : index
      %98 = vector.load %arg7[%c6, %c0_57, %c0_58] : memref<21x8x128xf32, #tpu.memory_space<vmem>>, vector<1x8x128xf32>
      %99 = vector.shape_cast %98 : vector<1x8x128xf32> to vector<8x128xf32>
      %100 = arith.addf %99, %86 : vector<8x128xf32>
      %c6_59 = arith.constant 6 : index
      %c0_60 = arith.constant 0 : index
      %c0_61 = arith.constant 0 : index
      %101 = vector.load %arg7[%c6_59, %c0_60, %c0_61] : memref<21x8x128xf32, #tpu.memory_space<vmem>>, vector<1x8x128xf32>
      %102 = vector.shape_cast %101 : vector<1x8x128xf32> to vector<8x128xf32>
      %103 = vector.shape_cast %100 : vector<8x128xf32> to vector<1x8x128xf32>
      tpu.vector_store %arg7[%c6_59, %c0_60, %c0_61], %103 {strides = array<i32>} : memref<21x8x128xf32, #tpu.memory_space<vmem>>, vector<1x8x128xf32>,
      %c7_i32 = arith.constant 7 : i32
      %104 = tpu.dynamic_rotate %72 by %c7_i32 dim 0 : vector<8x128xf32>, i32 -> vector<8x128xf32>
      %105 = arith.subf %104, %72 : vector<8x128xf32>
      %c7_i32_62 = arith.constant 7 : i32
      %106 = tpu.dynamic_rotate %76 by %c7_i32_62 dim 0 : vector<8x128xf32>, i32 -> vector<8x128xf32>
      %107 = arith.mulf %106, %76 : vector<8x128xf32>
      %c1_63 = arith.constant 1 : index
      %c0_64 = arith.constant 0 : index
      %c0_65 = arith.constant 0 : index
      %108 = vector.load %arg8[%c1_63, %c0_64, %c0_65] : memref<8x8x128xf32, #tpu.memory_space<vmem>>, vector<1x8x128xf32>
      %109 = vector.shape_cast %108 : vector<1x8x128xf32> to vector<8x128xf32>
      %110 = arith.mulf %107, %109 : vector<8x128xf32>
      %c7 = arith.constant 7 : index
      %c0_66 = arith.constant 0 : index
      %c0_67 = arith.constant 0 : index
      %111 = vector.load %arg7[%c7, %c0_66, %c0_67] : memref<21x8x128xf32, #tpu.memory_space<vmem>>, vector<1x8x128xf32>
      %112 = vector.shape_cast %111 : vector<1x8x128xf32> to vector<8x128xf32>
      %cst_68 = arith.constant 0.000000e+00 : f32
      %113 = vector.broadcast %cst_68 : f32 to vector<8x128xf32>
      %114 = arith.cmpf ogt, %110, %113 : vector<8x128xf32>
      %115 = math.absf %105 : vector<8x128xf32>
      %cst_69 = arith.constant 0.000000e+00 : f32
      %116 = vector.broadcast %cst_69 : f32 to vector<8x128xf32>
      %117 = arith.select %114, %115, %116 : vector<8x128xi1>, vector<8x128xf32>
      %118 = arith.addf %112, %117 : vector<8x128xf32>
      %c7_70 = arith.constant 7 : index
      %c0_71 = arith.constant 0 : index
      %c0_72 = arith.constant 0 : index
      %119 = vector.load %arg7[%c7_70, %c0_71, %c0_72] : memref<21x8x128xf32, #tpu.memory_space<vmem>>, vector<1x8x128xf32>
      %120 = vector.shape_cast %119 : vector<1x8x128xf32> to vector<8x128xf32>
      %121 = vector.shape_cast %118 : vector<8x128xf32> to vector<1x8x128xf32>
      tpu.vector_store %arg7[%c7_70, %c0_71, %c0_72], %121 {strides = array<i32>} : memref<21x8x128xf32, #tpu.memory_space<vmem>>, vector<1x8x128xf32>,
      %c8 = arith.constant 8 : index
      %c0_73 = arith.constant 0 : index
      %c0_74 = arith.constant 0 : index
      %122 = vector.load %arg7[%c8, %c0_73, %c0_74] : memref<21x8x128xf32, #tpu.memory_space<vmem>>, vector<1x8x128xf32>
      %123 = vector.shape_cast %122 : vector<1x8x128xf32> to vector<8x128xf32>
      %124 = arith.addf %123, %110 : vector<8x128xf32>
      %c8_75 = arith.constant 8 : index
      %c0_76 = arith.constant 0 : index
      %c0_77 = arith.constant 0 : index
      %125 = vector.load %arg7[%c8_75, %c0_76, %c0_77] : memref<21x8x128xf32, #tpu.memory_space<vmem>>, vector<1x8x128xf32>
      %126 = vector.shape_cast %125 : vector<1x8x128xf32> to vector<8x128xf32>
      %127 = vector.shape_cast %124 : vector<8x128xf32> to vector<1x8x128xf32>
      tpu.vector_store %arg7[%c8_75, %c0_76, %c0_77], %127 {strides = array<i32>} : memref<21x8x128xf32, #tpu.memory_space<vmem>>, vector<1x8x128xf32>,
      %c126_i32 = arith.constant 126 : i32
      %128 = tpu.dynamic_rotate %72 by %c126_i32 dim 1 : vector<8x128xf32>, i32 -> vector<8x128xf32>
      %129 = arith.subf %128, %72 : vector<8x128xf32>
      %c126_i32_78 = arith.constant 126 : i32
      %130 = tpu.dynamic_rotate %76 by %c126_i32_78 dim 1 : vector<8x128xf32>, i32 -> vector<8x128xf32>
      %131 = arith.mulf %130, %76 : vector<8x128xf32>
      %c2_79 = arith.constant 2 : index
      %c0_80 = arith.constant 0 : index
      %c0_81 = arith.constant 0 : index
      %132 = vector.load %arg8[%c2_79, %c0_80, %c0_81] : memref<8x8x128xf32, #tpu.memory_space<vmem>>, vector<1x8x128xf32>
      %133 = vector.shape_cast %132 : vector<1x8x128xf32> to vector<8x128xf32>
      %134 = arith.mulf %131, %133 : vector<8x128xf32>
      %c9 = arith.constant 9 : index
      %c0_82 = arith.constant 0 : index
      %c0_83 = arith.constant 0 : index
      %135 = vector.load %arg7[%c9, %c0_82, %c0_83] : memref<21x8x128xf32, #tpu.memory_space<vmem>>, vector<1x8x128xf32>
      %136 = vector.shape_cast %135 : vector<1x8x128xf32> to vector<8x128xf32>
      %cst_84 = arith.constant 0.000000e+00 : f32
      %137 = vector.broadcast %cst_84 : f32 to vector<8x128xf32>
      %138 = arith.cmpf ogt, %134, %137 : vector<8x128xf32>
      %139 = math.absf %129 : vector<8x128xf32>
      %cst_85 = arith.constant 0.000000e+00 : f32
      %140 = vector.broadcast %cst_85 : f32 to vector<8x128xf32>
      %141 = arith.select %138, %139, %140 : vector<8x128xi1>, vector<8x128xf32>
      %142 = arith.addf %136, %141 : vector<8x128xf32>
      %c9_86 = arith.constant 9 : index
      %c0_87 = arith.constant 0 : index
      %c0_88 = arith.constant 0 : index
      %143 = vector.load %arg7[%c9_86, %c0_87, %c0_88] : memref<21x8x128xf32, #tpu.memory_space<vmem>>, vector<1x8x128xf32>
      %144 = vector.shape_cast %143 : vector<1x8x128xf32> to vector<8x128xf32>
      %145 = vector.shape_cast %142 : vector<8x128xf32> to vector<1x8x128xf32>
      tpu.vector_store %arg7[%c9_86, %c0_87, %c0_88], %145 {strides = array<i32>} : memref<21x8x128xf32, #tpu.memory_space<vmem>>, vector<1x8x128xf32>,
      %c10 = arith.constant 10 : index
      %c0_89 = arith.constant 0 : index
      %c0_90 = arith.constant 0 : index
      %146 = vector.load %arg7[%c10, %c0_89, %c0_90] : memref<21x8x128xf32, #tpu.memory_space<vmem>>, vector<1x8x128xf32>
      %147 = vector.shape_cast %146 : vector<1x8x128xf32> to vector<8x128xf32>
      %148 = arith.addf %147, %134 : vector<8x128xf32>
      %c10_91 = arith.constant 10 : index
      %c0_92 = arith.constant 0 : index
      %c0_93 = arith.constant 0 : index
      %149 = vector.load %arg7[%c10_91, %c0_92, %c0_93] : memref<21x8x128xf32, #tpu.memory_space<vmem>>, vector<1x8x128xf32>
      %150 = vector.shape_cast %149 : vector<1x8x128xf32> to vector<8x128xf32>
      %151 = vector.shape_cast %148 : vector<8x128xf32> to vector<1x8x128xf32>
      tpu.vector_store %arg7[%c10_91, %c0_92, %c0_93], %151 {strides = array<i32>} : memref<21x8x128xf32, #tpu.memory_space<vmem>>, vector<1x8x128xf32>,
      %c6_i32 = arith.constant 6 : i32
      %152 = tpu.dynamic_rotate %72 by %c6_i32 dim 0 : vector<8x128xf32>, i32 -> vector<8x128xf32>
      %153 = arith.subf %152, %72 : vector<8x128xf32>
      %c6_i32_94 = arith.constant 6 : i32
      %154 = tpu.dynamic_rotate %76 by %c6_i32_94 dim 0 : vector<8x128xf32>, i32 -> vector<8x128xf32>
      %155 = arith.mulf %154, %76 : vector<8x128xf32>
      %c3_95 = arith.constant 3 : index
      %c0_96 = arith.constant 0 : index
      %c0_97 = arith.constant 0 : index
      %156 = vector.load %arg8[%c3_95, %c0_96, %c0_97] : memref<8x8x128xf32, #tpu.memory_space<vmem>>, vector<1x8x128xf32>
      %157 = vector.shape_cast %156 : vector<1x8x128xf32> to vector<8x128xf32>
      %158 = arith.mulf %155, %157 : vector<8x128xf32>
      %c11 = arith.constant 11 : index
      %c0_98 = arith.constant 0 : index
      %c0_99 = arith.constant 0 : index
      %159 = vector.load %arg7[%c11, %c0_98, %c0_99] : memref<21x8x128xf32, #tpu.memory_space<vmem>>, vector<1x8x128xf32>
      %160 = vector.shape_cast %159 : vector<1x8x128xf32> to vector<8x128xf32>
      %cst_100 = arith.constant 0.000000e+00 : f32
      %161 = vector.broadcast %cst_100 : f32 to vector<8x128xf32>
      %162 = arith.cmpf ogt, %158, %161 : vector<8x128xf32>
      %163 = math.absf %153 : vector<8x128xf32>
      %cst_101 = arith.constant 0.000000e+00 : f32
      %164 = vector.broadcast %cst_101 : f32 to vector<8x128xf32>
      %165 = arith.select %162, %163, %164 : vector<8x128xi1>, vector<8x128xf32>
      %166 = arith.addf %160, %165 : vector<8x128xf32>
      %c11_102 = arith.constant 11 : index
      %c0_103 = arith.constant 0 : index
      %c0_104 = arith.constant 0 : index
      %167 = vector.load %arg7[%c11_102, %c0_103, %c0_104] : memref<21x8x128xf32, #tpu.memory_space<vmem>>, vector<1x8x128xf32>
      %168 = vector.shape_cast %167 : vector<1x8x128xf32> to vector<8x128xf32>
      %169 = vector.shape_cast %166 : vector<8x128xf32> to vector<1x8x128xf32>
      tpu.vector_store %arg7[%c11_102, %c0_103, %c0_104], %169 {strides = array<i32>} : memref<21x8x128xf32, #tpu.memory_space<vmem>>, vector<1x8x128xf32>,
      %c12 = arith.constant 12 : index
      %c0_105 = arith.constant 0 : index
      %c0_106 = arith.constant 0 : index
      %170 = vector.load %arg7[%c12, %c0_105, %c0_106] : memref<21x8x128xf32, #tpu.memory_space<vmem>>, vector<1x8x128xf32>
      %171 = vector.shape_cast %170 : vector<1x8x128xf32> to vector<8x128xf32>
      %172 = arith.addf %171, %158 : vector<8x128xf32>
      %c12_107 = arith.constant 12 : index
      %c0_108 = arith.constant 0 : index
      %c0_109 = arith.constant 0 : index
      %173 = vector.load %arg7[%c12_107, %c0_108, %c0_109] : memref<21x8x128xf32, #tpu.memory_space<vmem>>, vector<1x8x128xf32>
      %174 = vector.shape_cast %173 : vector<1x8x128xf32> to vector<8x128xf32>
      %175 = vector.shape_cast %172 : vector<8x128xf32> to vector<1x8x128xf32>
      tpu.vector_store %arg7[%c12_107, %c0_108, %c0_109], %175 {strides = array<i32>} : memref<21x8x128xf32, #tpu.memory_space<vmem>>, vector<1x8x128xf32>,
      %c124_i32 = arith.constant 124 : i32
      %176 = tpu.dynamic_rotate %72 by %c124_i32 dim 1 : vector<8x128xf32>, i32 -> vector<8x128xf32>
      %177 = arith.subf %176, %72 : vector<8x128xf32>
      %c124_i32_110 = arith.constant 124 : i32
      %178 = tpu.dynamic_rotate %76 by %c124_i32_110 dim 1 : vector<8x128xf32>, i32 -> vector<8x128xf32>
      %179 = arith.mulf %178, %76 : vector<8x128xf32>
      %c4 = arith.constant 4 : index
      %c0_111 = arith.constant 0 : index
      %c0_112 = arith.constant 0 : index
      %180 = vector.load %arg8[%c4, %c0_111, %c0_112] : memref<8x8x128xf32, #tpu.memory_space<vmem>>, vector<1x8x128xf32>
      %181 = vector.shape_cast %180 : vector<1x8x128xf32> to vector<8x128xf32>
      %182 = arith.mulf %179, %181 : vector<8x128xf32>
      %c13 = arith.constant 13 : index
      %c0_113 = arith.constant 0 : index
      %c0_114 = arith.constant 0 : index
      %183 = vector.load %arg7[%c13, %c0_113, %c0_114] : memref<21x8x128xf32, #tpu.memory_space<vmem>>, vector<1x8x128xf32>
      %184 = vector.shape_cast %183 : vector<1x8x128xf32> to vector<8x128xf32>
      %cst_115 = arith.constant 0.000000e+00 : f32
      %185 = vector.broadcast %cst_115 : f32 to vector<8x128xf32>
      %186 = arith.cmpf ogt, %182, %185 : vector<8x128xf32>
      %187 = math.absf %177 : vector<8x128xf32>
      %cst_116 = arith.constant 0.000000e+00 : f32
      %188 = vector.broadcast %cst_116 : f32 to vector<8x128xf32>
      %189 = arith.select %186, %187, %188 : vector<8x128xi1>, vector<8x128xf32>
      %190 = arith.addf %184, %189 : vector<8x128xf32>
      %c13_117 = arith.constant 13 : index
      %c0_118 = arith.constant 0 : index
      %c0_119 = arith.constant 0 : index
      %191 = vector.load %arg7[%c13_117, %c0_118, %c0_119] : memref<21x8x128xf32, #tpu.memory_space<vmem>>, vector<1x8x128xf32>
      %192 = vector.shape_cast %191 : vector<1x8x128xf32> to vector<8x128xf32>
      %193 = vector.shape_cast %190 : vector<8x128xf32> to vector<1x8x128xf32>
      tpu.vector_store %arg7[%c13_117, %c0_118, %c0_119], %193 {strides = array<i32>} : memref<21x8x128xf32, #tpu.memory_space<vmem>>, vector<1x8x128xf32>,
      %c14 = arith.constant 14 : index
      %c0_120 = arith.constant 0 : index
      %c0_121 = arith.constant 0 : index
      %194 = vector.load %arg7[%c14, %c0_120, %c0_121] : memref<21x8x128xf32, #tpu.memory_space<vmem>>, vector<1x8x128xf32>
      %195 = vector.shape_cast %194 : vector<1x8x128xf32> to vector<8x128xf32>
      %196 = arith.addf %195, %182 : vector<8x128xf32>
      %c14_122 = arith.constant 14 : index
      %c0_123 = arith.constant 0 : index
      %c0_124 = arith.constant 0 : index
      %197 = vector.load %arg7[%c14_122, %c0_123, %c0_124] : memref<21x8x128xf32, #tpu.memory_space<vmem>>, vector<1x8x128xf32>
      %198 = vector.shape_cast %197 : vector<1x8x128xf32> to vector<8x128xf32>
      %199 = vector.shape_cast %196 : vector<8x128xf32> to vector<1x8x128xf32>
      tpu.vector_store %arg7[%c14_122, %c0_123, %c0_124], %199 {strides = array<i32>} : memref<21x8x128xf32, #tpu.memory_space<vmem>>, vector<1x8x128xf32>,
      %c4_i32 = arith.constant 4 : i32
      %200 = tpu.dynamic_rotate %72 by %c4_i32 dim 0 : vector<8x128xf32>, i32 -> vector<8x128xf32>
      %201 = arith.subf %200, %72 : vector<8x128xf32>
      %c4_i32_125 = arith.constant 4 : i32
      %202 = tpu.dynamic_rotate %76 by %c4_i32_125 dim 0 : vector<8x128xf32>, i32 -> vector<8x128xf32>
      %203 = arith.mulf %202, %76 : vector<8x128xf32>
      %c5_126 = arith.constant 5 : index
      %c0_127 = arith.constant 0 : index
      %c0_128 = arith.constant 0 : index
      %204 = vector.load %arg8[%c5_126, %c0_127, %c0_128] : memref<8x8x128xf32, #tpu.memory_space<vmem>>, vector<1x8x128xf32>
      %205 = vector.shape_cast %204 : vector<1x8x128xf32> to vector<8x128xf32>
      %206 = arith.mulf %203, %205 : vector<8x128xf32>
      %c15 = arith.constant 15 : index
      %c0_129 = arith.constant 0 : index
      %c0_130 = arith.constant 0 : index
      %207 = vector.load %arg7[%c15, %c0_129, %c0_130] : memref<21x8x128xf32, #tpu.memory_space<vmem>>, vector<1x8x128xf32>
      %208 = vector.shape_cast %207 : vector<1x8x128xf32> to vector<8x128xf32>
      %cst_131 = arith.constant 0.000000e+00 : f32
      %209 = vector.broadcast %cst_131 : f32 to vector<8x128xf32>
      %210 = arith.cmpf ogt, %206, %209 : vector<8x128xf32>
      %211 = math.absf %201 : vector<8x128xf32>
      %cst_132 = arith.constant 0.000000e+00 : f32
      %212 = vector.broadcast %cst_132 : f32 to vector<8x128xf32>
      %213 = arith.select %210, %211, %212 : vector<8x128xi1>, vector<8x128xf32>
      %214 = arith.addf %208, %213 : vector<8x128xf32>
      %c15_133 = arith.constant 15 : index
      %c0_134 = arith.constant 0 : index
      %c0_135 = arith.constant 0 : index
      %215 = vector.load %arg7[%c15_133, %c0_134, %c0_135] : memref<21x8x128xf32, #tpu.memory_space<vmem>>, vector<1x8x128xf32>
      %216 = vector.shape_cast %215 : vector<1x8x128xf32> to vector<8x128xf32>
      %217 = vector.shape_cast %214 : vector<8x128xf32> to vector<1x8x128xf32>
      tpu.vector_store %arg7[%c15_133, %c0_134, %c0_135], %217 {strides = array<i32>} : memref<21x8x128xf32, #tpu.memory_space<vmem>>, vector<1x8x128xf32>,
      %c16 = arith.constant 16 : index
      %c0_136 = arith.constant 0 : index
      %c0_137 = arith.constant 0 : index
      %218 = vector.load %arg7[%c16, %c0_136, %c0_137] : memref<21x8x128xf32, #tpu.memory_space<vmem>>, vector<1x8x128xf32>
      %219 = vector.shape_cast %218 : vector<1x8x128xf32> to vector<8x128xf32>
      %220 = arith.addf %219, %206 : vector<8x128xf32>
      %c16_138 = arith.constant 16 : index
      %c0_139 = arith.constant 0 : index
      %c0_140 = arith.constant 0 : index
      %221 = vector.load %arg7[%c16_138, %c0_139, %c0_140] : memref<21x8x128xf32, #tpu.memory_space<vmem>>, vector<1x8x128xf32>
      %222 = vector.shape_cast %221 : vector<1x8x128xf32> to vector<8x128xf32>
      %223 = vector.shape_cast %220 : vector<8x128xf32> to vector<1x8x128xf32>
      tpu.vector_store %arg7[%c16_138, %c0_139, %c0_140], %223 {strides = array<i32>} : memref<21x8x128xf32, #tpu.memory_space<vmem>>, vector<1x8x128xf32>,
      %c120_i32 = arith.constant 120 : i32
      %224 = tpu.dynamic_rotate %72 by %c120_i32 dim 1 : vector<8x128xf32>, i32 -> vector<8x128xf32>
      %225 = arith.subf %224, %72 : vector<8x128xf32>
      %c120_i32_141 = arith.constant 120 : i32
      %226 = tpu.dynamic_rotate %76 by %c120_i32_141 dim 1 : vector<8x128xf32>, i32 -> vector<8x128xf32>
      %227 = arith.mulf %226, %76 : vector<8x128xf32>
      %c6_142 = arith.constant 6 : index
      %c0_143 = arith.constant 0 : index
      %c0_144 = arith.constant 0 : index
      %228 = vector.load %arg8[%c6_142, %c0_143, %c0_144] : memref<8x8x128xf32, #tpu.memory_space<vmem>>, vector<1x8x128xf32>
      %229 = vector.shape_cast %228 : vector<1x8x128xf32> to vector<8x128xf32>
      %230 = arith.mulf %227, %229 : vector<8x128xf32>
      %c17 = arith.constant 17 : index
      %c0_145 = arith.constant 0 : index
      %c0_146 = arith.constant 0 : index
      %231 = vector.load %arg7[%c17, %c0_145, %c0_146] : memref<21x8x128xf32, #tpu.memory_space<vmem>>, vector<1x8x128xf32>
      %232 = vector.shape_cast %231 : vector<1x8x128xf32> to vector<8x128xf32>
      %cst_147 = arith.constant 0.000000e+00 : f32
      %233 = vector.broadcast %cst_147 : f32 to vector<8x128xf32>
      %234 = arith.cmpf ogt, %230, %233 : vector<8x128xf32>
      %235 = math.absf %225 : vector<8x128xf32>
      %cst_148 = arith.constant 0.000000e+00 : f32
      %236 = vector.broadcast %cst_148 : f32 to vector<8x128xf32>
      %237 = arith.select %234, %235, %236 : vector<8x128xi1>, vector<8x128xf32>
      %238 = arith.addf %232, %237 : vector<8x128xf32>
      %c17_149 = arith.constant 17 : index
      %c0_150 = arith.constant 0 : index
      %c0_151 = arith.constant 0 : index
      %239 = vector.load %arg7[%c17_149, %c0_150, %c0_151] : memref<21x8x128xf32, #tpu.memory_space<vmem>>, vector<1x8x128xf32>
      %240 = vector.shape_cast %239 : vector<1x8x128xf32> to vector<8x128xf32>
      %241 = vector.shape_cast %238 : vector<8x128xf32> to vector<1x8x128xf32>
      tpu.vector_store %arg7[%c17_149, %c0_150, %c0_151], %241 {strides = array<i32>} : memref<21x8x128xf32, #tpu.memory_space<vmem>>, vector<1x8x128xf32>,
      %c18 = arith.constant 18 : index
      %c0_152 = arith.constant 0 : index
      %c0_153 = arith.constant 0 : index
      %242 = vector.load %arg7[%c18, %c0_152, %c0_153] : memref<21x8x128xf32, #tpu.memory_space<vmem>>, vector<1x8x128xf32>
      %243 = vector.shape_cast %242 : vector<1x8x128xf32> to vector<8x128xf32>
      %244 = arith.addf %243, %230 : vector<8x128xf32>
      %c18_154 = arith.constant 18 : index
      %c0_155 = arith.constant 0 : index
      %c0_156 = arith.constant 0 : index
      %245 = vector.load %arg7[%c18_154, %c0_155, %c0_156] : memref<21x8x128xf32, #tpu.memory_space<vmem>>, vector<1x8x128xf32>
      %246 = vector.shape_cast %245 : vector<1x8x128xf32> to vector<8x128xf32>
      %247 = vector.shape_cast %244 : vector<8x128xf32> to vector<1x8x128xf32>
      tpu.vector_store %arg7[%c18_154, %c0_155, %c0_156], %247 {strides = array<i32>} : memref<21x8x128xf32, #tpu.memory_space<vmem>>, vector<1x8x128xf32>,
      %248 = vector.extract_strided_slice %72 {offsets = [7, 0], sizes = [1, 128], strides = [1, 1]} : vector<8x128xf32> to vector<1x128xf32>
      %c0_157 = arith.constant 0 : index
      %c0_158 = arith.constant 0 : index
      %c0_159 = arith.constant 0 : index
      %249 = vector.load %arg9[%c0_157, %c0_158, %c0_159] : memref<8x1x128xf32, #tpu.memory_space<vmem>>, vector<1x1x128xf32>
      %250 = vector.shape_cast %249 : vector<1x1x128xf32> to vector<1x128xf32>
      %251 = vector.shape_cast %248 : vector<1x128xf32> to vector<1x1x128xf32>
      tpu.vector_store %arg9[%c0_157, %c0_158, %c0_159], %251 {strides = array<i32>} : memref<8x1x128xf32, #tpu.memory_space<vmem>>, vector<1x1x128xf32>,
      %252 = vector.extract_strided_slice %76 {offsets = [7, 0], sizes = [1, 128], strides = [1, 1]} : vector<8x128xf32> to vector<1x128xf32>
      %c1_160 = arith.constant 1 : index
      %c0_161 = arith.constant 0 : index
      %c0_162 = arith.constant 0 : index
      %253 = vector.load %arg9[%c1_160, %c0_161, %c0_162] : memref<8x1x128xf32, #tpu.memory_space<vmem>>, vector<1x1x128xf32>
      %254 = vector.shape_cast %253 : vector<1x1x128xf32> to vector<1x128xf32>
      %255 = vector.shape_cast %252 : vector<1x128xf32> to vector<1x1x128xf32>
      tpu.vector_store %arg9[%c1_160, %c0_161, %c0_162], %255 {strides = array<i32>} : memref<8x1x128xf32, #tpu.memory_space<vmem>>, vector<1x1x128xf32>,
      %256 = vector.extract_strided_slice %72 {offsets = [6, 0], sizes = [1, 128], strides = [1, 1]} : vector<8x128xf32> to vector<1x128xf32>
      %c2_163 = arith.constant 2 : index
      %c0_164 = arith.constant 0 : index
      %c0_165 = arith.constant 0 : index
      %257 = vector.load %arg9[%c2_163, %c0_164, %c0_165] : memref<8x1x128xf32, #tpu.memory_space<vmem>>, vector<1x1x128xf32>
      %258 = vector.shape_cast %257 : vector<1x1x128xf32> to vector<1x128xf32>
      %259 = vector.shape_cast %256 : vector<1x128xf32> to vector<1x1x128xf32>
      tpu.vector_store %arg9[%c2_163, %c0_164, %c0_165], %259 {strides = array<i32>} : memref<8x1x128xf32, #tpu.memory_space<vmem>>, vector<1x1x128xf32>,
      %260 = vector.extract_strided_slice %76 {offsets = [6, 0], sizes = [1, 128], strides = [1, 1]} : vector<8x128xf32> to vector<1x128xf32>
      %c3_166 = arith.constant 3 : index
      %c0_167 = arith.constant 0 : index
      %c0_168 = arith.constant 0 : index
      %261 = vector.load %arg9[%c3_166, %c0_167, %c0_168] : memref<8x1x128xf32, #tpu.memory_space<vmem>>, vector<1x1x128xf32>
      %262 = vector.shape_cast %261 : vector<1x1x128xf32> to vector<1x128xf32>
      %263 = vector.shape_cast %260 : vector<1x128xf32> to vector<1x1x128xf32>
      tpu.vector_store %arg9[%c3_166, %c0_167, %c0_168], %263 {strides = array<i32>} : memref<8x1x128xf32, #tpu.memory_space<vmem>>, vector<1x1x128xf32>,
      %264 = vector.extract_strided_slice %72 {offsets = [4, 0], sizes = [1, 128], strides = [1, 1]} : vector<8x128xf32> to vector<1x128xf32>
      %c4_169 = arith.constant 4 : index
      %c0_170 = arith.constant 0 : index
      %c0_171 = arith.constant 0 : index
      %265 = vector.load %arg9[%c4_169, %c0_170, %c0_171] : memref<8x1x128xf32, #tpu.memory_space<vmem>>, vector<1x1x128xf32>
      %266 = vector.shape_cast %265 : vector<1x1x128xf32> to vector<1x128xf32>
      %267 = vector.shape_cast %264 : vector<1x128xf32> to vector<1x1x128xf32>
      tpu.vector_store %arg9[%c4_169, %c0_170, %c0_171], %267 {strides = array<i32>} : memref<8x1x128xf32, #tpu.memory_space<vmem>>, vector<1x1x128xf32>,
      %268 = vector.extract_strided_slice %76 {offsets = [4, 0], sizes = [1, 128], strides = [1, 1]} : vector<8x128xf32> to vector<1x128xf32>
      %c5_172 = arith.constant 5 : index
      %c0_173 = arith.constant 0 : index
      %c0_174 = arith.constant 0 : index
      %269 = vector.load %arg9[%c5_172, %c0_173, %c0_174] : memref<8x1x128xf32, #tpu.memory_space<vmem>>, vector<1x1x128xf32>
      %270 = vector.shape_cast %269 : vector<1x1x128xf32> to vector<1x128xf32>
      %271 = vector.shape_cast %268 : vector<1x128xf32> to vector<1x1x128xf32>
      tpu.vector_store %arg9[%c5_172, %c0_173, %c0_174], %271 {strides = array<i32>} : memref<8x1x128xf32, #tpu.memory_space<vmem>>, vector<1x1x128xf32>,
      %272 = vector.extract_strided_slice %72 {offsets = [0, 0], sizes = [1, 128], strides = [1, 1]} : vector<8x128xf32> to vector<1x128xf32>
      %c6_175 = arith.constant 6 : index
      %c0_176 = arith.constant 0 : index
      %c0_177 = arith.constant 0 : index
      %273 = vector.load %arg9[%c6_175, %c0_176, %c0_177] : memref<8x1x128xf32, #tpu.memory_space<vmem>>, vector<1x1x128xf32>
      %274 = vector.shape_cast %273 : vector<1x1x128xf32> to vector<1x128xf32>
      %275 = vector.shape_cast %272 : vector<1x128xf32> to vector<1x1x128xf32>
      tpu.vector_store %arg9[%c6_175, %c0_176, %c0_177], %275 {strides = array<i32>} : memref<8x1x128xf32, #tpu.memory_space<vmem>>, vector<1x1x128xf32>,
      %276 = vector.extract_strided_slice %76 {offsets = [0, 0], sizes = [1, 128], strides = [1, 1]} : vector<8x128xf32> to vector<1x128xf32>
      %c7_178 = arith.constant 7 : index
      %c0_179 = arith.constant 0 : index
      %c0_180 = arith.constant 0 : index
      %277 = vector.load %arg9[%c7_178, %c0_179, %c0_180] : memref<8x1x128xf32, #tpu.memory_space<vmem>>, vector<1x1x128xf32>
      %278 = vector.shape_cast %277 : vector<1x1x128xf32> to vector<1x128xf32>
      %279 = vector.shape_cast %276 : vector<1x128xf32> to vector<1x1x128xf32>
      tpu.vector_store %arg9[%c7_178, %c0_179, %c0_180], %279 {strides = array<i32>} : memref<8x1x128xf32, #tpu.memory_space<vmem>>, vector<1x1x128xf32>,
    } else {
    }
    %c0_i32_6 = arith.constant 0 : i32
    %13 = arith.cmpi eq, %arg0, %c0_i32_6 : i32
    %14 = arith.andi %13, %2 : i1
    %15 = arith.extui %14 : i1 to i32
    %c0_i32_7 = arith.constant 0 : i32
    %16 = arith.cmpi ne, %15, %c0_i32_7 : i32
    scf.if %16 {
      %c0 = arith.constant 0 : index
      %c0_12 = arith.constant 0 : index
      %c0_13 = arith.constant 0 : index
      %24 = vector.load %arg7[%c0, %c0_12, %c0_13] : memref<21x8x128xf32, #tpu.memory_space<vmem>>, vector<1x8x128xf32>
      %25 = vector.shape_cast %24 : vector<1x8x128xf32> to vector<8x128xf32>
      %cst = arith.constant dense<0.000000e+00> : vector<8xf32>
      %26 = vector.multi_reduction <add>, %25, %cst [1] : vector<8x128xf32> to vector<8xf32>
      %27 = vector.shape_cast %26 : vector<8xf32> to vector<8x1xf32>
      %cst_14 = arith.constant dense<0.000000e+00> : vector<1xf32>
      %28 = vector.multi_reduction <add>, %27, %cst_14 [0] : vector<8x1xf32> to vector<1xf32>
      %29 = vector.shape_cast %28 : vector<1xf32> to vector<1x1xf32>
      %c1 = arith.constant 1 : index
      %c0_15 = arith.constant 0 : index
      %c0_16 = arith.constant 0 : index
      %30 = vector.load %arg7[%c1, %c0_15, %c0_16] : memref<21x8x128xf32, #tpu.memory_space<vmem>>, vector<1x8x128xf32>
      %31 = vector.shape_cast %30 : vector<1x8x128xf32> to vector<8x128xf32>
      %cst_17 = arith.constant dense<0.000000e+00> : vector<8xf32>
      %32 = vector.multi_reduction <add>, %31, %cst_17 [1] : vector<8x128xf32> to vector<8xf32>
      %33 = vector.shape_cast %32 : vector<8xf32> to vector<8x1xf32>
      %cst_18 = arith.constant dense<0.000000e+00> : vector<1xf32>
      %34 = vector.multi_reduction <add>, %33, %cst_18 [0] : vector<8x1xf32> to vector<1xf32>
      %35 = vector.shape_cast %34 : vector<1xf32> to vector<1x1xf32>
      %36 = arith.divf %29, %35 : vector<1x1xf32>
      %c2 = arith.constant 2 : index
      %c0_19 = arith.constant 0 : index
      %c0_20 = arith.constant 0 : index
      %37 = vector.load %arg7[%c2, %c0_19, %c0_20] : memref<21x8x128xf32, #tpu.memory_space<vmem>>, vector<1x8x128xf32>
      %38 = vector.shape_cast %37 : vector<1x8x128xf32> to vector<8x128xf32>
      %cst_21 = arith.constant dense<0.000000e+00> : vector<8xf32>
      %39 = vector.multi_reduction <add>, %38, %cst_21 [1] : vector<8x128xf32> to vector<8xf32>
      %40 = vector.shape_cast %39 : vector<8xf32> to vector<8x1xf32>
      %cst_22 = arith.constant dense<0.000000e+00> : vector<1xf32>
      %41 = vector.multi_reduction <add>, %40, %cst_22 [0] : vector<8x1xf32> to vector<1xf32>
      %42 = vector.shape_cast %41 : vector<1xf32> to vector<1x1xf32>
      %c3 = arith.constant 3 : index
      %c0_23 = arith.constant 0 : index
      %c0_24 = arith.constant 0 : index
      %43 = vector.load %arg7[%c3, %c0_23, %c0_24] : memref<21x8x128xf32, #tpu.memory_space<vmem>>, vector<1x8x128xf32>
      %44 = vector.shape_cast %43 : vector<1x8x128xf32> to vector<8x128xf32>
      %cst_25 = arith.constant dense<0.000000e+00> : vector<8xf32>
      %45 = vector.multi_reduction <add>, %44, %cst_25 [1] : vector<8x128xf32> to vector<8xf32>
      %46 = vector.shape_cast %45 : vector<8xf32> to vector<8x1xf32>
      %cst_26 = arith.constant dense<0.000000e+00> : vector<1xf32>
      %47 = vector.multi_reduction <add>, %46, %cst_26 [0] : vector<8x1xf32> to vector<1xf32>
      %48 = vector.shape_cast %47 : vector<1xf32> to vector<1x1xf32>
      %49 = arith.divf %42, %48 : vector<1x1xf32>
      %cst_27 = arith.constant 1.000000e+00 : f32
      %50 = vector.broadcast %cst_27 : f32 to vector<1x1xf32>
      %51 = arith.divf %50, %36 : vector<1x1xf32>
      %52 = vector.extract %51[0, 0] : f32 from vector<1x1xf32>
      %c0_28 = arith.constant 0 : index
      %53 = memref.load %arg10[%c0_28] : memref<2xf32, #tpu.memory_space<smem>>
      memref.store %52, %arg10[%c0_28] : memref<2xf32, #tpu.memory_space<smem>>
      %cst_29 = arith.constant 1.000000e+00 : f32
      %54 = vector.broadcast %cst_29 : f32 to vector<1x1xf32>
      %55 = arith.divf %54, %49 : vector<1x1xf32>
      %56 = vector.extract %55[0, 0] : f32 from vector<1x1xf32>
      %c1_30 = arith.constant 1 : index
      %57 = memref.load %arg10[%c1_30] : memref<2xf32, #tpu.memory_space<smem>>
      memref.store %56, %arg10[%c1_30] : memref<2xf32, #tpu.memory_space<smem>>
    } else {
    }
    %c1_i32_8 = arith.constant 1 : i32
    %17 = arith.cmpi eq, %arg0, %c1_i32_8 : i32
    %18 = arith.extui %17 : i1 to i32
    %c0_i32_9 = arith.constant 0 : i32
    %19 = arith.cmpi ne, %18, %c0_i32_9 : i32
    scf.if %19 {
      %c0 = arith.constant 0 : index
      %c0_12 = arith.constant 0 : index
      %c0_13 = arith.constant 0 : index
      %24 = vector.load %arg4[%c0, %c0_12, %c0_13] : memref<1x8x128xf32, #tpu.memory_space<vmem>>, vector<1x8x128xf32>
      %25 = vector.shape_cast %24 : vector<1x8x128xf32> to vector<8x128xf32>
      %c0_14 = arith.constant 0 : index
      %c0_15 = arith.constant 0 : index
      %c0_16 = arith.constant 0 : index
      %26 = vector.load %arg5[%c0_14, %c0_15, %c0_16] : memref<1x8x128xf32, #tpu.memory_space<vmem>>, vector<1x8x128xf32>
      %27 = vector.shape_cast %26 : vector<1x8x128xf32> to vector<8x128xf32>
      %c0_17 = arith.constant 0 : index
      %28 = memref.load %arg3[%c0_17] : memref<2xf32, #tpu.memory_space<smem>>
      %29 = vector.broadcast %28 : f32 to vector<8x128xf32>
      %30 = arith.subf %25, %29 : vector<8x128xf32>
      %c0_18 = arith.constant 0 : index
      %31 = memref.load %arg10[%c0_18] : memref<2xf32, #tpu.memory_space<smem>>
      %32 = vector.broadcast %31 : f32 to vector<8x128xf32>
      %33 = arith.mulf %30, %32 : vector<8x128xf32>
      %c1 = arith.constant 1 : index
      %34 = memref.load %arg3[%c1] : memref<2xf32, #tpu.memory_space<smem>>
      %35 = vector.broadcast %34 : f32 to vector<8x128xf32>
      %36 = arith.subf %27, %35 : vector<8x128xf32>
      %c1_19 = arith.constant 1 : index
      %37 = memref.load %arg10[%c1_19] : memref<2xf32, #tpu.memory_space<smem>>
      %38 = vector.broadcast %37 : f32 to vector<8x128xf32>
      %39 = arith.mulf %36, %38 : vector<8x128xf32>
      %40 = tpu.weird %33 : vector<8x128xf32> -> vector<8x128xi1>
      %cst = arith.constant dense<true> : vector<8x128xi1>
      %41 = arith.xori %40, %cst : vector<8x128xi1>
      %c4 = arith.constant 4 : index
      %c0_20 = arith.constant 0 : index
      %c0_21 = arith.constant 0 : index
      %42 = vector.load %arg7[%c4, %c0_20, %c0_21] : memref<21x8x128xf32, #tpu.memory_space<vmem>>, vector<1x8x128xf32>
      %43 = vector.shape_cast %42 : vector<1x8x128xf32> to vector<8x128xf32>
      %44 = arith.subf %39, %33 : vector<8x128xf32>
      %45 = math.absf %44 : vector<8x128xf32>
      %cst_22 = arith.constant 0.000000e+00 : f32
      %46 = vector.broadcast %cst_22 : f32 to vector<8x128xf32>
      %47 = arith.select %41, %45, %46 : vector<8x128xi1>, vector<8x128xf32>
      %48 = arith.addf %43, %47 : vector<8x128xf32>
      %c4_23 = arith.constant 4 : index
      %c0_24 = arith.constant 0 : index
      %c0_25 = arith.constant 0 : index
      %49 = vector.load %arg7[%c4_23, %c0_24, %c0_25] : memref<21x8x128xf32, #tpu.memory_space<vmem>>, vector<1x8x128xf32>
      %50 = vector.shape_cast %49 : vector<1x8x128xf32> to vector<8x128xf32>
      %51 = vector.shape_cast %48 : vector<8x128xf32> to vector<1x8x128xf32>
      tpu.vector_store %arg7[%c4_23, %c0_24, %c0_25], %51 {strides = array<i32>} : memref<21x8x128xf32, #tpu.memory_space<vmem>>, vector<1x8x128xf32>,
    } else {
    }
    %c1_i32_10 = arith.constant 1 : i32
    %20 = arith.cmpi eq, %arg0, %c1_i32_10 : i32
    %21 = arith.andi %20, %2 : i1
    %22 = arith.extui %21 : i1 to i32
    %c0_i32_11 = arith.constant 0 : i32
    %23 = arith.cmpi ne, %22, %c0_i32_11 : i32
    scf.if %23 {
      %c4 = arith.constant 4 : index
      %c0 = arith.constant 0 : index
      %c0_12 = arith.constant 0 : index
      %24 = vector.load %arg7[%c4, %c0, %c0_12] : memref<21x8x128xf32, #tpu.memory_space<vmem>>, vector<1x8x128xf32>
      %25 = vector.shape_cast %24 : vector<1x8x128xf32> to vector<8x128xf32>
      %cst = arith.constant dense<0.000000e+00> : vector<8xf32>
      %26 = vector.multi_reduction <add>, %25, %cst [1] : vector<8x128xf32> to vector<8xf32>
      %27 = vector.shape_cast %26 : vector<8xf32> to vector<8x1xf32>
      %cst_13 = arith.constant dense<0.000000e+00> : vector<1xf32>
      %28 = vector.multi_reduction <add>, %27, %cst_13 [0] : vector<8x1xf32> to vector<1xf32>
      %29 = vector.shape_cast %28 : vector<1xf32> to vector<1x1xf32>
      %cst_14 = arith.constant 0.001953125 : f32
      %30 = vector.broadcast %cst_14 : f32 to vector<1x1xf32>
      %31 = arith.mulf %29, %30 : vector<1x1xf32>
      %cst_15 = arith.constant 0.000000e+00 : f32
      %32 = vector.broadcast %cst_15 : f32 to vector<1x1xf32>
      %c5 = arith.constant 5 : index
      %c0_16 = arith.constant 0 : index
      %c0_17 = arith.constant 0 : index
      %33 = vector.load %arg7[%c5, %c0_16, %c0_17] : memref<21x8x128xf32, #tpu.memory_space<vmem>>, vector<1x8x128xf32>
      %34 = vector.shape_cast %33 : vector<1x8x128xf32> to vector<8x128xf32>
      %cst_18 = arith.constant dense<0.000000e+00> : vector<8xf32>
      %35 = vector.multi_reduction <add>, %34, %cst_18 [1] : vector<8x128xf32> to vector<8xf32>
      %36 = vector.shape_cast %35 : vector<8xf32> to vector<8x1xf32>
      %cst_19 = arith.constant dense<0.000000e+00> : vector<1xf32>
      %37 = vector.multi_reduction <add>, %36, %cst_19 [0] : vector<8x1xf32> to vector<1xf32>
      %38 = vector.shape_cast %37 : vector<1xf32> to vector<1x1xf32>
      %c6 = arith.constant 6 : index
      %c0_20 = arith.constant 0 : index
      %c0_21 = arith.constant 0 : index
      %39 = vector.load %arg7[%c6, %c0_20, %c0_21] : memref<21x8x128xf32, #tpu.memory_space<vmem>>, vector<1x8x128xf32>
      %40 = vector.shape_cast %39 : vector<1x8x128xf32> to vector<8x128xf32>
      %cst_22 = arith.constant dense<0.000000e+00> : vector<8xf32>
      %41 = vector.multi_reduction <add>, %40, %cst_22 [1] : vector<8x128xf32> to vector<8xf32>
      %42 = vector.shape_cast %41 : vector<8xf32> to vector<8x1xf32>
      %cst_23 = arith.constant dense<0.000000e+00> : vector<1xf32>
      %43 = vector.multi_reduction <add>, %42, %cst_23 [0] : vector<8x1xf32> to vector<1xf32>
      %44 = vector.shape_cast %43 : vector<1xf32> to vector<1x1xf32>
      %45 = arith.divf %38, %44 : vector<1x1xf32>
      %c7 = arith.constant 7 : index
      %c0_24 = arith.constant 0 : index
      %c0_25 = arith.constant 0 : index
      %46 = vector.load %arg7[%c7, %c0_24, %c0_25] : memref<21x8x128xf32, #tpu.memory_space<vmem>>, vector<1x8x128xf32>
      %47 = vector.shape_cast %46 : vector<1x8x128xf32> to vector<8x128xf32>
      %cst_26 = arith.constant dense<0.000000e+00> : vector<8xf32>
      %48 = vector.multi_reduction <add>, %47, %cst_26 [1] : vector<8x128xf32> to vector<8xf32>
      %49 = vector.shape_cast %48 : vector<8xf32> to vector<8x1xf32>
      %cst_27 = arith.constant dense<0.000000e+00> : vector<1xf32>
      %50 = vector.multi_reduction <add>, %49, %cst_27 [0] : vector<8x1xf32> to vector<1xf32>
      %51 = vector.shape_cast %50 : vector<1xf32> to vector<1x1xf32>
      %c8 = arith.constant 8 : index
      %c0_28 = arith.constant 0 : index
      %c0_29 = arith.constant 0 : index
      %52 = vector.load %arg7[%c8, %c0_28, %c0_29] : memref<21x8x128xf32, #tpu.memory_space<vmem>>, vector<1x8x128xf32>
      %53 = vector.shape_cast %52 : vector<1x8x128xf32> to vector<8x128xf32>
      %cst_30 = arith.constant dense<0.000000e+00> : vector<8xf32>
      %54 = vector.multi_reduction <add>, %53, %cst_30 [1] : vector<8x128xf32> to vector<8xf32>
      %55 = vector.shape_cast %54 : vector<8xf32> to vector<8x1xf32>
      %cst_31 = arith.constant dense<0.000000e+00> : vector<1xf32>
      %56 = vector.multi_reduction <add>, %55, %cst_31 [0] : vector<8x1xf32> to vector<1xf32>
      %57 = vector.shape_cast %56 : vector<1xf32> to vector<1x1xf32>
      %58 = arith.divf %51, %57 : vector<1x1xf32>
      %59 = arith.addf %45, %58 : vector<1x1xf32>
      %cst_32 = arith.constant 5.000000e-01 : f32
      %60 = vector.broadcast %cst_32 : f32 to vector<1x1xf32>
      %61 = arith.mulf %60, %59 : vector<1x1xf32>
      %62 = arith.addf %32, %61 : vector<1x1xf32>
      %c9 = arith.constant 9 : index
      %c0_33 = arith.constant 0 : index
      %c0_34 = arith.constant 0 : index
      %63 = vector.load %arg7[%c9, %c0_33, %c0_34] : memref<21x8x128xf32, #tpu.memory_space<vmem>>, vector<1x8x128xf32>
      %64 = vector.shape_cast %63 : vector<1x8x128xf32> to vector<8x128xf32>
      %cst_35 = arith.constant dense<0.000000e+00> : vector<8xf32>
      %65 = vector.multi_reduction <add>, %64, %cst_35 [1] : vector<8x128xf32> to vector<8xf32>
      %66 = vector.shape_cast %65 : vector<8xf32> to vector<8x1xf32>
      %cst_36 = arith.constant dense<0.000000e+00> : vector<1xf32>
      %67 = vector.multi_reduction <add>, %66, %cst_36 [0] : vector<8x1xf32> to vector<1xf32>
      %68 = vector.shape_cast %67 : vector<1xf32> to vector<1x1xf32>
      %c10 = arith.constant 10 : index
      %c0_37 = arith.constant 0 : index
      %c0_38 = arith.constant 0 : index
      %69 = vector.load %arg7[%c10, %c0_37, %c0_38] : memref<21x8x128xf32, #tpu.memory_space<vmem>>, vector<1x8x128xf32>
      %70 = vector.shape_cast %69 : vector<1x8x128xf32> to vector<8x128xf32>
      %cst_39 = arith.constant dense<0.000000e+00> : vector<8xf32>
      %71 = vector.multi_reduction <add>, %70, %cst_39 [1] : vector<8x128xf32> to vector<8xf32>
      %72 = vector.shape_cast %71 : vector<8xf32> to vector<8x1xf32>
      %cst_40 = arith.constant dense<0.000000e+00> : vector<1xf32>
      %73 = vector.multi_reduction <add>, %72, %cst_40 [0] : vector<8x1xf32> to vector<1xf32>
      %74 = vector.shape_cast %73 : vector<1xf32> to vector<1x1xf32>
      %75 = arith.divf %68, %74 : vector<1x1xf32>
      %c11 = arith.constant 11 : index
      %c0_41 = arith.constant 0 : index
      %c0_42 = arith.constant 0 : index
      %76 = vector.load %arg7[%c11, %c0_41, %c0_42] : memref<21x8x128xf32, #tpu.memory_space<vmem>>, vector<1x8x128xf32>
      %77 = vector.shape_cast %76 : vector<1x8x128xf32> to vector<8x128xf32>
      %cst_43 = arith.constant dense<0.000000e+00> : vector<8xf32>
      %78 = vector.multi_reduction <add>, %77, %cst_43 [1] : vector<8x128xf32> to vector<8xf32>
      %79 = vector.shape_cast %78 : vector<8xf32> to vector<8x1xf32>
      %cst_44 = arith.constant dense<0.000000e+00> : vector<1xf32>
      %80 = vector.multi_reduction <add>, %79, %cst_44 [0] : vector<8x1xf32> to vector<1xf32>
      %81 = vector.shape_cast %80 : vector<1xf32> to vector<1x1xf32>
      %c12 = arith.constant 12 : index
      %c0_45 = arith.constant 0 : index
      %c0_46 = arith.constant 0 : index
      %82 = vector.load %arg7[%c12, %c0_45, %c0_46] : memref<21x8x128xf32, #tpu.memory_space<vmem>>, vector<1x8x128xf32>
      %83 = vector.shape_cast %82 : vector<1x8x128xf32> to vector<8x128xf32>
      %cst_47 = arith.constant dense<0.000000e+00> : vector<8xf32>
      %84 = vector.multi_reduction <add>, %83, %cst_47 [1] : vector<8x128xf32> to vector<8xf32>
      %85 = vector.shape_cast %84 : vector<8xf32> to vector<8x1xf32>
      %cst_48 = arith.constant dense<0.000000e+00> : vector<1xf32>
      %86 = vector.multi_reduction <add>, %85, %cst_48 [0] : vector<8x1xf32> to vector<1xf32>
      %87 = vector.shape_cast %86 : vector<1xf32> to vector<1x1xf32>
      %88 = arith.divf %81, %87 : vector<1x1xf32>
      %89 = arith.addf %75, %88 : vector<1x1xf32>
      %cst_49 = arith.constant 5.000000e-01 : f32
      %90 = vector.broadcast %cst_49 : f32 to vector<1x1xf32>
      %91 = arith.mulf %90, %89 : vector<1x1xf32>
      %92 = arith.addf %62, %91 : vector<1x1xf32>
      %c13 = arith.constant 13 : index
      %c0_50 = arith.constant 0 : index
      %c0_51 = arith.constant 0 : index
      %93 = vector.load %arg7[%c13, %c0_50, %c0_51] : memref<21x8x128xf32, #tpu.memory_space<vmem>>, vector<1x8x128xf32>
      %94 = vector.shape_cast %93 : vector<1x8x128xf32> to vector<8x128xf32>
      %cst_52 = arith.constant dense<0.000000e+00> : vector<8xf32>
      %95 = vector.multi_reduction <add>, %94, %cst_52 [1] : vector<8x128xf32> to vector<8xf32>
      %96 = vector.shape_cast %95 : vector<8xf32> to vector<8x1xf32>
      %cst_53 = arith.constant dense<0.000000e+00> : vector<1xf32>
      %97 = vector.multi_reduction <add>, %96, %cst_53 [0] : vector<8x1xf32> to vector<1xf32>
      %98 = vector.shape_cast %97 : vector<1xf32> to vector<1x1xf32>
      %c14 = arith.constant 14 : index
      %c0_54 = arith.constant 0 : index
      %c0_55 = arith.constant 0 : index
      %99 = vector.load %arg7[%c14, %c0_54, %c0_55] : memref<21x8x128xf32, #tpu.memory_space<vmem>>, vector<1x8x128xf32>
      %100 = vector.shape_cast %99 : vector<1x8x128xf32> to vector<8x128xf32>
      %cst_56 = arith.constant dense<0.000000e+00> : vector<8xf32>
      %101 = vector.multi_reduction <add>, %100, %cst_56 [1] : vector<8x128xf32> to vector<8xf32>
      %102 = vector.shape_cast %101 : vector<8xf32> to vector<8x1xf32>
      %cst_57 = arith.constant dense<0.000000e+00> : vector<1xf32>
      %103 = vector.multi_reduction <add>, %102, %cst_57 [0] : vector<8x1xf32> to vector<1xf32>
      %104 = vector.shape_cast %103 : vector<1xf32> to vector<1x1xf32>
      %105 = arith.divf %98, %104 : vector<1x1xf32>
      %c15 = arith.constant 15 : index
      %c0_58 = arith.constant 0 : index
      %c0_59 = arith.constant 0 : index
      %106 = vector.load %arg7[%c15, %c0_58, %c0_59] : memref<21x8x128xf32, #tpu.memory_space<vmem>>, vector<1x8x128xf32>
      %107 = vector.shape_cast %106 : vector<1x8x128xf32> to vector<8x128xf32>
      %cst_60 = arith.constant dense<0.000000e+00> : vector<8xf32>
      %108 = vector.multi_reduction <add>, %107, %cst_60 [1] : vector<8x128xf32> to vector<8xf32>
      %109 = vector.shape_cast %108 : vector<8xf32> to vector<8x1xf32>
      %cst_61 = arith.constant dense<0.000000e+00> : vector<1xf32>
      %110 = vector.multi_reduction <add>, %109, %cst_61 [0] : vector<8x1xf32> to vector<1xf32>
      %111 = vector.shape_cast %110 : vector<1xf32> to vector<1x1xf32>
      %c16 = arith.constant 16 : index
      %c0_62 = arith.constant 0 : index
      %c0_63 = arith.constant 0 : index
      %112 = vector.load %arg7[%c16, %c0_62, %c0_63] : memref<21x8x128xf32, #tpu.memory_space<vmem>>, vector<1x8x128xf32>
      %113 = vector.shape_cast %112 : vector<1x8x128xf32> to vector<8x128xf32>
      %cst_64 = arith.constant dense<0.000000e+00> : vector<8xf32>
      %114 = vector.multi_reduction <add>, %113, %cst_64 [1] : vector<8x128xf32> to vector<8xf32>
      %115 = vector.shape_cast %114 : vector<8xf32> to vector<8x1xf32>
      %cst_65 = arith.constant dense<0.000000e+00> : vector<1xf32>
      %116 = vector.multi_reduction <add>, %115, %cst_65 [0] : vector<8x1xf32> to vector<1xf32>
      %117 = vector.shape_cast %116 : vector<1xf32> to vector<1x1xf32>
      %118 = arith.divf %111, %117 : vector<1x1xf32>
      %119 = arith.addf %105, %118 : vector<1x1xf32>
      %cst_66 = arith.constant 5.000000e-01 : f32
      %120 = vector.broadcast %cst_66 : f32 to vector<1x1xf32>
      %121 = arith.mulf %120, %119 : vector<1x1xf32>
      %122 = arith.addf %92, %121 : vector<1x1xf32>
      %c17 = arith.constant 17 : index
      %c0_67 = arith.constant 0 : index
      %c0_68 = arith.constant 0 : index
      %123 = vector.load %arg7[%c17, %c0_67, %c0_68] : memref<21x8x128xf32, #tpu.memory_space<vmem>>, vector<1x8x128xf32>
      %124 = vector.shape_cast %123 : vector<1x8x128xf32> to vector<8x128xf32>
      %cst_69 = arith.constant dense<0.000000e+00> : vector<8xf32>
      %125 = vector.multi_reduction <add>, %124, %cst_69 [1] : vector<8x128xf32> to vector<8xf32>
      %126 = vector.shape_cast %125 : vector<8xf32> to vector<8x1xf32>
      %cst_70 = arith.constant dense<0.000000e+00> : vector<1xf32>
      %127 = vector.multi_reduction <add>, %126, %cst_70 [0] : vector<8x1xf32> to vector<1xf32>
      %128 = vector.shape_cast %127 : vector<1xf32> to vector<1x1xf32>
      %c18 = arith.constant 18 : index
      %c0_71 = arith.constant 0 : index
      %c0_72 = arith.constant 0 : index
      %129 = vector.load %arg7[%c18, %c0_71, %c0_72] : memref<21x8x128xf32, #tpu.memory_space<vmem>>, vector<1x8x128xf32>
      %130 = vector.shape_cast %129 : vector<1x8x128xf32> to vector<8x128xf32>
      %cst_73 = arith.constant dense<0.000000e+00> : vector<8xf32>
      %131 = vector.multi_reduction <add>, %130, %cst_73 [1] : vector<8x128xf32> to vector<8xf32>
      %132 = vector.shape_cast %131 : vector<8xf32> to vector<8x1xf32>
      %cst_74 = arith.constant dense<0.000000e+00> : vector<1xf32>
      %133 = vector.multi_reduction <add>, %132, %cst_74 [0] : vector<8x1xf32> to vector<1xf32>
      %134 = vector.shape_cast %133 : vector<1xf32> to vector<1x1xf32>
      %135 = arith.divf %128, %134 : vector<1x1xf32>
      %c19 = arith.constant 19 : index
      %c0_75 = arith.constant 0 : index
      %c0_76 = arith.constant 0 : index
      %136 = vector.load %arg7[%c19, %c0_75, %c0_76] : memref<21x8x128xf32, #tpu.memory_space<vmem>>, vector<1x8x128xf32>
      %137 = vector.shape_cast %136 : vector<1x8x128xf32> to vector<8x128xf32>
      %cst_77 = arith.constant dense<0.000000e+00> : vector<8xf32>
      %138 = vector.multi_reduction <add>, %137, %cst_77 [1] : vector<8x128xf32> to vector<8xf32>
      %139 = vector.shape_cast %138 : vector<8xf32> to vector<8x1xf32>
      %cst_78 = arith.constant dense<0.000000e+00> : vector<1xf32>
      %140 = vector.multi_reduction <add>, %139, %cst_78 [0] : vector<8x1xf32> to vector<1xf32>
      %141 = vector.shape_cast %140 : vector<1xf32> to vector<1x1xf32>
      %c20 = arith.constant 20 : index
      %c0_79 = arith.constant 0 : index
      %c0_80 = arith.constant 0 : index
      %142 = vector.load %arg7[%c20, %c0_79, %c0_80] : memref<21x8x128xf32, #tpu.memory_space<vmem>>, vector<1x8x128xf32>
      %143 = vector.shape_cast %142 : vector<1x8x128xf32> to vector<8x128xf32>
      %cst_81 = arith.constant dense<0.000000e+00> : vector<8xf32>
      %144 = vector.multi_reduction <add>, %143, %cst_81 [1] : vector<8x128xf32> to vector<8xf32>
      %145 = vector.shape_cast %144 : vector<8xf32> to vector<8x1xf32>
      %cst_82 = arith.constant dense<0.000000e+00> : vector<1xf32>
      %146 = vector.multi_reduction <add>, %145, %cst_82 [0] : vector<8x1xf32> to vector<1xf32>
      %147 = vector.shape_cast %146 : vector<1xf32> to vector<1x1xf32>
      %148 = arith.divf %141, %147 : vector<1x1xf32>
      %149 = arith.addf %135, %148 : vector<1x1xf32>
      %cst_83 = arith.constant 5.000000e-01 : f32
      %150 = vector.broadcast %cst_83 : f32 to vector<1x1xf32>
      %151 = arith.mulf %150, %149 : vector<1x1xf32>
      %152 = arith.addf %122, %151 : vector<1x1xf32>
      %cst_84 = arith.constant 2.500000e-01 : f32
      %153 = vector.broadcast %cst_84 : f32 to vector<1x1xf32>
      %154 = arith.mulf %152, %153 : vector<1x1xf32>
      %cst_85 = arith.constant 5.000000e-01 : f32
      %155 = vector.broadcast %cst_85 : f32 to vector<1x1xf32>
      %156 = arith.mulf %155, %154 : vector<1x1xf32>
      %157 = arith.addf %31, %156 : vector<1x1xf32>
      %c0_86 = arith.constant 0 : index
      %c0_87 = arith.constant 0 : index
      %158 = vector.load %arg6[%c0_86, %c0_87] : memref<1x1xf32, #tpu.memory_space<vmem>>, vector<1x1xf32>
      tpu.vector_store %arg6[%c0_86, %c0_87], %157 {strides = array<i32>} : memref<1x1xf32, #tpu.memory_space<vmem>>, vector<1x1xf32>,
    } else {
    }
    return
  }
  func.func @transform_0(%arg0: i32, %arg1: i32, %arg2: i32) -> i32 {
    %c0_i32 = arith.constant 0 : i32
    %c0_i32_0 = arith.constant 0 : i32
    return %c0_i32 : i32
  }
  func.func @transform_1(%arg0: i32, %arg1: i32, %arg2: i32) -> (i32, i32, i32) {
    %c0_i32 = arith.constant 0 : i32
    %c0_i32_0 = arith.constant 0 : i32
    return %arg1, %arg2, %c0_i32 : i32, i32, i32
  }
  func.func @transform_2(%arg0: i32, %arg1: i32, %arg2: i32) -> (i32, i32, i32) {
    %c0_i32 = arith.constant 0 : i32
    %c0_i32_0 = arith.constant 0 : i32
    return %arg1, %arg2, %c0_i32 : i32, i32, i32
  }
  func.func @transform_3(%arg0: i32, %arg1: i32, %arg2: i32) -> (i32, i32) {
    %c0_i32 = arith.constant 0 : i32
    %c0_i32_0 = arith.constant 0 : i32
    %c0_i32_1 = arith.constant 0 : i32
    return %c0_i32, %c0_i32_0 : i32, i32
  }
}

</mosaic_0001>

<llo_original>
// kernel: tpu_custom_call.1
$region0: #{tpu_custom_call.1}
  #allocation0 [shape = 'u32[]', space=smem, size = 0x4, offset = 0x4, fixed_abs, tag = 'smem constant byte address 0x4 - core index']
  #allocation1 [shape = 'u32[144,128]{1,0:T(1,128)}', space=vmem, size = 0x12000, scoped, tag = 'internal scratch']
  #allocation2 [shape = 'f32[21,8,128]{2,1,0:T(8,128)}', space=vmem, size = 0x15000, scoped, tag = 'scratch operand']
  #allocation3 [shape = 'f32[8,8,128]{2,1,0:T(8,128)}', space=vmem, size = 0x8000, scoped, tag = 'scratch operand']
  #allocation4 [shape = 'f32[8,1,128]{2,1,0:T(1,128)}', space=vmem, size = 0x1000, scoped, tag = 'scratch operand']
  #allocation5 [shape = 'f32[2]{0:T(128)}', space=smem, size = 0x200, scoped, tag = 'scratch operand']
  %s0 = inlined_call_operand.hbm [shape: f32[2], index: 0, kind: input, shape index: {}]
  %s1 = inlined_call_operand.hbm [shape: f32[2,16,128], index: 1, kind: input, shape index: {}]
  %s2 = inlined_call_operand.hbm [shape: f32[2,16,128], index: 2, kind: input, shape index: {}]
  %s3 = inlined_call_operand.hbm [shape: f32[1,1], index: 3, kind: output, shape index: {}]
  %s4 = sld [smem:[#allocation0]]
  $region81: #{tpu_custom_call.1} parent=0
    _
  %s6 = ssub.s32 1, %s4
  %s7 = scalar_select 0, %s6, %s4
  $region1: #{tpu_custom_call.1} parent=0
    #allocation6 [shape = 'u8[512]{0}', space=smem, size = 0x200, scoped, tag = 'input window, operand 0, single buffered']
    #allocation7 [shape = 's32[2]{0}', space=sflag, size = 0x8, scoped, tag = 'scoped memory for tpu_custom_call.1']
    #allocation8 [shape = 's32[2]{0}', space=sflag, size = 0x8, scoped, tag = 'scoped memory for tpu_custom_call.1']
    #allocation9 [shape = 's32[2]{0}', space=sflag, size = 0x8, scoped, tag = 'scoped memory for tpu_custom_call.1']
    #allocation10 [shape = 'u8[8192]{0}', space=vmem, size = 0x2000, scoped, tag = 'input window, operand 1']
    #allocation11 [shape = 'u8[8192]{0}', space=vmem, size = 0x2000, scoped, tag = 'input window, operand 2']
    #allocation12 [shape = 's32[2]{0}', space=sflag, size = 0x8, scoped, tag = 'scoped memory for tpu_custom_call.1']
    #allocation13 [shape = 'u8[512]{0}', space=vmem, size = 0x400, scoped, tag = 'output window, operand 0, single buffered']
    %8 = vsyncpa [#allocation9], 0
    %9 = vsyncpa [#allocation7], 0
    %s10 = scalar_lea.sflag [#allocation7], 1
    %11 = vsyncpa %s10, 0
    %12 = vsyncpa [#allocation12], 0
    %s13 = scalar_lea.sflag [#allocation12], 1
    %14 = vsyncpa %s13, 0
    %15 = vsyncpa [#allocation8], 0
    loop: start=0, step=1, limit=10
    $region2: #{tpu_custom_call.1} parent=1 // loop_pre_header
      _
    $region3: #{tpu_custom_call.1} parent=1 // loop_header
      %s17 = sphi 0, %s21
      %p18 = scmp.ge.s32.totalorder %s17, 10
      %s24 = sphi 0, %s43
      %s25 = sphi 0, %s39
      %s26 = sphi 0, %s35
      %s27 = sphi 0, %s24
      %s28 = sphi 0, %s25
      %s29 = sphi 0, %s26
      %s30 = sphi 0, %s27
      %s31 = sphi 0, %s28
      %s32 = sphi 0, %s29
      %s44 = sphi 0, %s44
      %s46 = sphi 0, %s44
      %s47 = sphi 0, %s46
      %s61 = sphi 0, %s47
      %s69 = sphi 0, %s71
      %s72 = sphi 0, %s69
      %s73 = sphi 0, %s72
      %s89 = sphi 0, %s73
      %s97 = sphi 0, %s99
      %s100 = sphi 0, %s97
      %s101 = sphi 0, %s100
      %s117 = sphi 0, %s101
      %s121 = sphi 0, %s121
      %s123 = sphi 0, %s121
      %s124 = sphi 0, %s123
      %s138 = sphi 0, %s124
    $region4: #{tpu_custom_call.1} parent=1 // loop_header_branch
      %20 = sbr.rel (%p18) target = $region8
    $region5: #{tpu_custom_call.1} parent=1 // loop_body
      %s22 = ssub.s32 %s17, 1
      %s23 = ssub.s32 %s17, 2
      %s33 = sadd.s32 1, %s26
      %p34 = scmp.ge.s32.totalorder %s33, 2
      %s35 = scalar_select %p34, 0, %s33
      %s36 = sadd.s32 1, %s25
      %s37 = scalar_select %p34, %s36, %s25
      %p38 = scmp.ge.s32.totalorder %s37, 2
      %s39 = scalar_select %p38, 0, %s37
      %s40 = sadd.s32 1, %s24
      %s41 = scalar_select %p38, %s40, %s24
      %p42 = scmp.ge.s32.totalorder %s41, 2
      %s43 = scalar_select %p42, 0, %s41
      %s45 = sadd.s32 %s44, 1
      %p48 = scmp.eq.s32.totalorder %s17, 7
      %p49 = scmp.ne.s32.totalorder %s44, %s46
      %p50 = scmp.eq.s32.totalorder %s17, 0
      %p51 = por %p49, %p50
      %p52 = scmp.ne.s32.totalorder %s44, %s46
      %p53 = scmp.eq.s32.totalorder %s22, 7
      %p54 = por %p52, %p53
      %p55 = scmp.ne.s32.totalorder %s46, %s47
      %p56 = scmp.eq.s32.totalorder %s22, 0
      %p57 = por %p55, %p56
      %p58 = scmp.ne.s32.totalorder %s46, %s47
      %p59 = scmp.eq.s32.totalorder %s23, 7
      %p60 = por %p58, %p59
      %p62 = scmp.ne.s32.totalorder %s47, %s61
      %p63 = scmp.eq.s32.totalorder %s23, 0
      %p64 = por %p62, %p63
      %s65 = ssub.s32 %s25, %s39
      %s66 = ssub.s32 %s26, %s35
      %s67 = sor.u32 %s65, %s66
      %p68 = scmp.eq.s32.totalorder %s67, 0
      %s70 = sadd.s32 %s69, 1
      %s71 = scalar_select %p68, %s69, %s70
      %p74 = pneg %p68
      %p75 = scmp.eq.s32.totalorder %s17, 7
      %p76 = por %p74, %p75
      %p77 = scmp.ne.s32.totalorder %s69, %s72
      %p78 = scmp.eq.s32.totalorder %s17, 0
      %p79 = por %p77, %p78
      %p80 = scmp.ne.s32.totalorder %s69, %s72
      %p81 = scmp.eq.s32.totalorder %s22, 7
      %p82 = por %p80, %p81
      %p83 = scmp.ne.s32.totalorder %s72, %s73
      %p84 = scmp.eq.s32.totalorder %s22, 0
      %p85 = por %p83, %p84
      %p86 = scmp.ne.s32.totalorder %s72, %s73
      %p87 = scmp.eq.s32.totalorder %s23, 7
      %p88 = por %p86, %p87
      %p90 = scmp.ne.s32.totalorder %s73, %s89
      %p91 = scmp.eq.s32.totalorder %s23, 0
      %p92 = por %p90, %p91
      %s93 = ssub.s32 %s25, %s39
      %s94 = ssub.s32 %s26, %s35
      %s95 = sor.u32 %s93, %s94
      %p96 = scmp.eq.s32.totalorder %s95, 0
      %s98 = sadd.s32 %s97, 1
      %s99 = scalar_select %p96, %s97, %s98
      %p102 = pneg %p96
      %p103 = scmp.eq.s32.totalorder %s17, 7
      %p104 = por %p102, %p103
      %p105 = scmp.ne.s32.totalorder %s97, %s100
      %p106 = scmp.eq.s32.totalorder %s17, 0
      %p107 = por %p105, %p106
      %p108 = scmp.ne.s32.totalorder %s97, %s100
      %p109 = scmp.eq.s32.totalorder %s22, 7
      %p110 = por %p108, %p109
      %p111 = scmp.ne.s32.totalorder %s100, %s101
      %p112 = scmp.eq.s32.totalorder %s22, 0
      %p113 = por %p111, %p112
      %p114 = scmp.ne.s32.totalorder %s100, %s101
      %p115 = scmp.eq.s32.totalorder %s23, 7
      %p116 = por %p114, %p115
      %p118 = scmp.ne.s32.totalorder %s101, %s117
      %p119 = scmp.eq.s32.totalorder %s23, 0
      %p120 = por %p118, %p119
      %s122 = sadd.s32 %s121, 1
      %p125 = scmp.eq.s32.totalorder %s17, 7
      %p126 = scmp.ne.s32.totalorder %s121, %s123
      %p127 = scmp.eq.s32.totalorder %s17, 0
      %p128 = por %p126, %p127
      %p129 = scmp.ne.s32.totalorder %s121, %s123
      %p130 = scmp.eq.s32.totalorder %s22, 7
      %p131 = por %p129, %p130
      %p132 = scmp.ne.s32.totalorder %s123, %s124
      %p133 = scmp.eq.s32.totalorder %s22, 0
      %p134 = por %p132, %p133
      %p135 = scmp.ne.s32.totalorder %s123, %s124
      %p136 = scmp.eq.s32.totalorder %s23, 7
      %p137 = por %p135, %p136
      %p139 = scmp.ne.s32.totalorder %s124, %s138
      %p140 = scmp.eq.s32.totalorder %s23, 0
      %p141 = por %p139, %p140
      %p142 = scmp.le.s32.totalorder 1, %s17
      %p143 = scmp.lt.s32.totalorder %s17, 9
      %p144 = pnand %p142, %p143
      %p145 = pneg %p144
      // Predicated region
      $region9: #{tpu_custom_call.1} parent=5 // pred_check
        _
      $region10: #{tpu_custom_call.1} parent=5 // pred_check_branch
        %147 = sbr.rel (%p144) target = $region12
      $region11: #{tpu_custom_call.1} parent=5 // pred_region
        %s148 = ssub.s32 %s17, 1
        // Predicated region
        $region13: #{tpu_custom_call.1} parent=11 // pred_check
          %p149 = pneg %p57
        $region14: #{tpu_custom_call.1} parent=11 // pred_check_branch
          %151 = sbr.rel (%p149) target = $region16
        $region15: #{tpu_custom_call.1} parent=11 // pred_region
          %s153 = ssub.s32 16, 16
          %154 = vsyncadd [#allocation9], %s153
          %157 = dma.hbm_to_smem %s0, 16, [#allocation6], [#allocation9]
        $region16: #{tpu_custom_call.1} parent=11 // pred_fallthru
          _
      $region12: #{tpu_custom_call.1} parent=5 // pred_fallthru
        _
      %p158 = scmp.lt.s32.totalorder %s17, 8
      // Predicated region
      $region17: #{tpu_custom_call.1} parent=5 // pred_check
        %p159 = pneg %p158
      $region18: #{tpu_custom_call.1} parent=5 // pred_check_branch
        %161 = sbr.rel (%p159) target = $region20
      $region19: #{tpu_custom_call.1} parent=5 // pred_region
        // Predicated region
        $region21: #{tpu_custom_call.1} parent=19 // pred_check
          %p162 = pneg %p79
        $region22: #{tpu_custom_call.1} parent=19 // pred_check_branch
          %164 = sbr.rel (%p162) target = $region24
        $region23: #{tpu_custom_call.1} parent=19 // pred_region
          %s165 = sand.u32 %s69, 1
          %s166 = scalar_lea.sflag [#allocation7], %s165
          %s167 = sand.u32 %s69, 1
          %s168 = smul.addr %s167, 8
          %s169 = scalar_lea.vmem [#allocation10], %s168
          %s171 = ssub.s32 128, 128
          %172 = vsyncadd %s166, %s171
          %s173 = smul.addr %s25, 2
          %s174 = sadd.s32 %s26, %s173
          %s175 = smul.addr %s174, 128
          %s176 = scalar_lea.hbm %s1, %s175
          %s178 = sshll.u32 %s169, 4
          %s179 = int_to_ptr.vmem [resolvable:$true] %s178
          %181 = dma.hbm_to_vmem [thread:$0]  %s176, 128, %s179, %s166
        $region24: #{tpu_custom_call.1} parent=19 // pred_fallthru
          _
        // Predicated region
        $region25: #{tpu_custom_call.1} parent=19 // pred_check
          %p182 = pneg %p107
        $region26: #{tpu_custom_call.1} parent=19 // pred_check_branch
          %184 = sbr.rel (%p182) target = $region28
        $region27: #{tpu_custom_call.1} parent=19 // pred_region
          %s185 = sand.u32 %s97, 1
          %s186 = scalar_lea.sflag [#allocation12], %s185
          %s187 = sand.u32 %s97, 1
          %s188 = smul.addr %s187, 8
          %s189 = scalar_lea.vmem [#allocation11], %s188
          %s191 = ssub.s32 128, 128
          %192 = vsyncadd %s186, %s191
          %s193 = smul.addr %s25, 2
          %s194 = sadd.s32 %s26, %s193
          %s195 = smul.addr %s194, 128
          %s196 = scalar_lea.hbm %s2, %s195
          %s198 = sshll.u32 %s189, 4
          %s199 = int_to_ptr.vmem [resolvable:$true] %s198
          %201 = dma.hbm_to_vmem [thread:$0]  %s196, 128, %s199, %s186
        $region28: #{tpu_custom_call.1} parent=19 // pred_fallthru
          _
      $region20: #{tpu_custom_call.1} parent=5 // pred_fallthru
        _
      %p202 = scmp.le.s32.totalorder 1, %s17
      %p203 = scmp.lt.s32.totalorder %s17, 9
      %p204 = pnand %p202, %p203
      %p205 = pneg %p204
      // Predicated region
      $region29: #{tpu_custom_call.1} parent=5 // pred_check
        _
      $region30: #{tpu_custom_call.1} parent=5 // pred_check_branch
        %207 = sbr.rel (%p204) target = $region32
      $region31: #{tpu_custom_call.1} parent=5 // pred_region
        %s208 = ssub.s32 %s17, 1
        // Predicated region
        $region33: #{tpu_custom_call.1} parent=31 // pred_check
          %p209 = pneg %p57
        $region34: #{tpu_custom_call.1} parent=31 // pred_check_branch
          %211 = sbr.rel (%p209) target = $region36
        $region35: #{tpu_custom_call.1} parent=31 // pred_region
          %212 = dma.done [#allocation9], 16
        $region36: #{tpu_custom_call.1} parent=31 // pred_fallthru
          _
        %s213 = sand.u32 %s72, 1
        %s214 = scalar_lea.sflag [#allocation7], %s213
        %s215 = sand.u32 %s72, 1
        %s216 = smul.addr %s215, 8
        %s217 = scalar_lea.vmem [#allocation10], %s216
        // Predicated region
        $region37: #{tpu_custom_call.1} parent=31 // pred_check
          %p218 = pneg %p85
        $region38: #{tpu_custom_call.1} parent=31 // pred_check_branch
          %220 = sbr.rel (%p218) target = $region40
        $region39: #{tpu_custom_call.1} parent=31 // pred_region
          %221 = dma.done %s214, 128
        $region40: #{tpu_custom_call.1} parent=31 // pred_fallthru
          _
        %s222 = sand.u32 %s100, 1
        %s223 = scalar_lea.sflag [#allocation12], %s222
        %s224 = sand.u32 %s100, 1
        %s225 = smul.addr %s224, 8
        %s226 = scalar_lea.vmem [#allocation11], %s225
        // Predicated region
        $region41: #{tpu_custom_call.1} parent=31 // pred_check
          %p227 = pneg %p113
        $region42: #{tpu_custom_call.1} parent=31 // pred_check_branch
          %229 = sbr.rel (%p227) target = $region44
        $region43: #{tpu_custom_call.1} parent=31 // pred_region
          %230 = dma.done %s223, 128
        $region44: #{tpu_custom_call.1} parent=31 // pred_fallthru
          _
        %231 = sfence
        %p232 = pneg %p57
        %p233 = pneg %p54
        %s234 = sand.u32 %s72, 1
        %s235 = scalar_lea.sflag [#allocation7], %s234
        %s236 = sand.u32 %s72, 1
        %s237 = smul.addr %s236, 8
        %s238 = scalar_lea.vmem [#allocation10], %s237
        %p239 = pneg %p85
        %p240 = pneg %p82
        %s241 = sand.u32 %s100, 1
        %s242 = scalar_lea.sflag [#allocation12], %s241
        %s243 = sand.u32 %s100, 1
        %s244 = smul.addr %s243, 8
        %s245 = scalar_lea.vmem [#allocation11], %s244
        %p246 = pneg %p113
        %p247 = pneg %p110
        %p248 = pneg %p134
        %p249 = pneg %p131
        %p250 = scmp.eq.s32.totalorder %s28, 1
        %p251 = scmp.eq.s32.totalorder %s29, 1
        %p252 = pnand %p250, %p251
        %p253 = pneg %p252
        %p254 = scmp.eq.s32.totalorder %s27, 0
        %p255 = scmp.eq.s32.totalorder %s28, 0
        %p256 = pnand %p254, %p255
        %p257 = pneg %p256
        %p258 = scmp.eq.s32.totalorder %s29, 0
        %p259 = pnand %p257, %p258
        %p260 = pneg %p259
        // Predicated region
        $region45: #{tpu_custom_call.1} parent=31 // pred_check
          _
        $region46: #{tpu_custom_call.1} parent=31 // pred_check_branch
          %262 = sbr.rel (%p259) target = $region48
        $region47: #{tpu_custom_call.1} parent=31 // pred_region
          %263 = vst [vmem:[#allocation2] sm:$0xff] 0.0
          %264 = vst [vmem:[#allocation2 + $0x8] sm:$0xff] 0.0
          %265 = vst [vmem:[#allocation2 + $0x10] sm:$0xff] 0.0
          %266 = vst [vmem:[#allocation2 + $0x18] sm:$0xff] 0.0
          %267 = vst [vmem:[#allocation2 + $0x20] sm:$0xff] 0.0
          %268 = vst [vmem:[#allocation2 + $0x28] sm:$0xff] 0.0
          %269 = vst [vmem:[#allocation2 + $0x30] sm:$0xff] 0.0
          %270 = vst [vmem:[#allocation2 + $0x38] sm:$0xff] 0.0
          %271 = vst [vmem:[#allocation2 + $0x40] sm:$0xff] 0.0
          %272 = vst [vmem:[#allocation2 + $0x48] sm:$0xff] 0.0
          %273 = vst [vmem:[#allocation2 + $0x50] sm:$0xff] 0.0
          %274 = vst [vmem:[#allocation2 + $0x58] sm:$0xff] 0.0
          %275 = vst [vmem:[#allocation2 + $0x60] sm:$0xff] 0.0
          %276 = vst [vmem:[#allocation2 + $0x68] sm:$0xff] 0.0
          %277 = vst [vmem:[#allocation2 + $0x70] sm:$0xff] 0.0
          %278 = vst [vmem:[#allocation2 + $0x78] sm:$0xff] 0.0
          %279 = vst [vmem:[#allocation2 + $0x80] sm:$0xff] 0.0
          %280 = vst [vmem:[#allocation2 + $0x88] sm:$0xff] 0.0
          %281 = vst [vmem:[#allocation2 + $0x90] sm:$0xff] 0.0
          %282 = vst [vmem:[#allocation2 + $0x98] sm:$0xff] 0.0
          %283 = vst [vmem:[#allocation2 + $0xa0] sm:$0xff] 0.0
          %v284 = vlaneseq
          %v285 = vshrl.u32 %v284, 7
          %v286 = vlaneseq
          %v287 = vand.u32 %v286, 127
          %vm288 = vcmp.lt.s32.totalorder %v287, 127
          %v289 = vsel %vm288, 1, 0
          %v290 = vcvt.s32.f32 %v289
          %291 = vst [vmem:[#allocation3] sm:$0xff] %v290
          %vm292 = vcmp.lt.s32.totalorder %v285, 7
          %v293 = vsel %vm292, 1, 0
          %v294 = vcvt.s32.f32 %v293
          %s295 = scalar_lea.vmem [#allocation3], 8
          %296 = vst [vmem:[%s295] sm:$0xff] %v294
          %v297 = vand.u32 %v285, 1
          %vm298 = vcmp.eq.s32.totalorder %v297, 0
          %v299 = vand.u32 %v287, 1
          %vm300 = vcmp.eq.s32.totalorder %v299, 0
          %vm301 = vmand %vm298, %vm300
          %vm302 = vcmp.lt.s32.totalorder %v287, 126
          %vm303 = vmand %vm301, %vm302
          %v304 = vsel %vm303, 1, 0
          %v305 = vcvt.s32.f32 %v304
          %s306 = scalar_lea.vmem [#allocation3], 16
          %307 = vst [vmem:[%s306] sm:$0xff] %v305
          %vm308 = vcmp.lt.s32.totalorder %v285, 6
          %vm309 = vmand %vm301, %vm308
          %v310 = vsel %vm309, 1, 0
          %v311 = vcvt.s32.f32 %v310
          %s312 = scalar_lea.vmem [#allocation3], 24
          %313 = vst [vmem:[%s312] sm:$0xff] %v311
          %v314 = vand.u32 %v285, 3
          %vm315 = vcmp.eq.s32.totalorder %v314, 0
          %v316 = vand.u32 %v287, 3
          %vm317 = vcmp.eq.s32.totalorder %v316, 0
          %vm318 = vmand %vm315, %vm317
          %vm319 = vcmp.lt.s32.totalorder %v287, 124
          %vm320 = vmand %vm318, %vm319
          %v321 = vsel %vm320, 1, 0
          %v322 = vcvt.s32.f32 %v321
          %s323 = scalar_lea.vmem [#allocation3], 32
          %324 = vst [vmem:[%s323] sm:$0xff] %v322
          %vm325 = vcmp.lt.s32.totalorder %v285, 4
          %vm326 = vmand %vm318, %vm325
          %v327 = vsel %vm326, 1, 0
          %v328 = vcvt.s32.f32 %v327
          %s329 = scalar_lea.vmem [#allocation3], 40
          %330 = vst [vmem:[%s329] sm:$0xff] %v328
          %v331 = vand.u32 %v285, 7
          %vm332 = vcmp.eq.s32.totalorder %v331, 0
          %v333 = vand.u32 %v287, 7
          %vm334 = vcmp.eq.s32.totalorder %v333, 0
          %vm335 = vmand %vm332, %vm334
          %vm336 = vcmp.lt.s32.totalorder %v287, 120
          %vm337 = vmand %vm335, %vm336
          %v338 = vsel %vm337, 1, 0
          %v339 = vcvt.s32.f32 %v338
          %s340 = scalar_lea.vmem [#allocation3], 48
          %341 = vst [vmem:[%s340] sm:$0xff] %v339
          %vm342 = vcmp.lt.s32.totalorder %v285, 0
          %vm343 = vmand %vm335, %vm342
          %v344 = vsel %vm343, 1, 0
          %v345 = vcvt.s32.f32 %v344
          %s346 = scalar_lea.vmem [#allocation3], 56
          %347 = vst [vmem:[%s346] sm:$0xff] %v345
        $region48: #{tpu_custom_call.1} parent=31 // pred_fallthru
          _
        // Predicated region
        $region49: #{tpu_custom_call.1} parent=31 // pred_check
          %p348 = pneg %p254
        $region50: #{tpu_custom_call.1} parent=31 // pred_check_branch
          %350 = sbr.rel (%p348) target = $region52
        $region51: #{tpu_custom_call.1} parent=31 // pred_region
          %v351 = vld [vmem:[%s217] sm:$0xff]
          %v352 = vld [vmem:[%s226] sm:$0xff]
          %s353 = sld [smem:[#allocation6]]
          %s354 = sld [smem:[#allocation6 + $0x1]]
          %vm355 = vcmp.ne.f32.partialorder %v351, %v351
          %vm356 = vmxor %vm355, 1
          %vm357 = vcmp.ne.f32.partialorder %v352, %v352
          %vm358 = vmxor %vm357, 1
          %v359 = vld [vmem:[#allocation2] sm:$0xff]
          %v360 = vstv %s353
          %v361 = vsub.f32 %v351, %v360
          %v362 = vand.u32 2147483647, %v361
          %v363 = vsel %vm356, %v362, 0.0
          %v364 = vadd.f32 %v359, %v363
          %365 = vst [vmem:[#allocation2] sm:$0xff] %v364
          %s366 = scalar_lea.vmem [#allocation2], 8
          %v367 = vld [vmem:[%s366] sm:$0xff]
          %v368 = vsel %vm356, 1, 0
          %v369 = vcvt.s32.f32 %v368
          %v370 = vadd.f32 %v367, %v369
          %371 = vst [vmem:[%s366] sm:$0xff] %v370
          %s372 = scalar_lea.vmem [#allocation2], 16
          %v373 = vld [vmem:[%s372] sm:$0xff]
          %v374 = vstv %s354
          %v375 = vsub.f32 %v352, %v374
          %v376 = vand.u32 2147483647, %v375
          %v377 = vsel %vm358, %v376, 0.0
          %v378 = vadd.f32 %v373, %v377
          %379 = vst [vmem:[%s372] sm:$0xff] %v378
          %s380 = scalar_lea.vmem [#allocation2], 24
          %v381 = vld [vmem:[%s380] sm:$0xff]
          %v382 = vsel %vm358, 1, 0
          %v383 = vcvt.s32.f32 %v382
          %v384 = vadd.f32 %v381, %v383
          %385 = vst [vmem:[%s380] sm:$0xff] %v384
          %v386 = vsub.f32 %v352, %v351
          %vm387 = vweird.f32 %v351
          %vm388 = vmxor %vm387, 1
          %v389 = vsel %vm388, 1, 0
          %v390 = vcvt.s32.f32 %v389
          %p391 = scmp.gt.s32.totalorder %s29, 0
          // Predicated region
          $region53: #{tpu_custom_call.1} parent=51 // pred_check
            %p392 = pneg %p391
          $region54: #{tpu_custom_call.1} parent=51 // pred_check_branch
            %394 = sbr.rel (%p392) target = $region56
          $region55: #{tpu_custom_call.1} parent=51 // pred_region
            %v395 = vlaneseq
            %v396 = vand.u32 %v395, 127
            %v397 = vld [vmem:[#allocation4] sm:$0x1]
            %v398 = vsub.f32 %v386, %v397
            %s399 = scalar_lea.vmem [#allocation4], 1
            %v400 = vld [vmem:[%s399] sm:$0x1]
            %v401 = vmul.f32 %v390, %v400
            %s402 = scalar_lea.vmem [#allocation2], 56
            %v403 = vld [vmem:[%s402] sm:$0x1]
            %vm404 = vcmp.gt.f32.partialorder %v401, 0.0
            %v405 = vand.u32 2147483647, %v398
            %v406 = vsel %vm404, %v405, 0.0
            %v407 = vadd.f32 %v403, %v406
            %408 = vst [vmem:[%s402] sm:$0x1] %v407
            %s409 = scalar_lea.vmem [#allocation2], 64
            %v410 = vld [vmem:[%s409] sm:$0x1]
            %v411 = vadd.f32 %v410, %v401
            %412 = vst [vmem:[%s409] sm:$0x1] %v411
            %s413 = scalar_lea.vmem [#allocation4], 2
            %v414 = vld [vmem:[%s413] sm:$0x1]
            %v415 = vsub.f32 %v386, %v414
            %s416 = scalar_lea.vmem [#allocation4], 3
            %v417 = vld [vmem:[%s416] sm:$0x1]
            %v418 = vmul.f32 %v390, %v417
            %v419 = vand.u32 %v396, 1
            %vm420 = vcmp.eq.s32.totalorder %v419, 0
            %v421 = vsel %vm420, 1, 0
            %v422 = vcvt.s32.f32 %v421
            %v423 = vmul.f32 %v418, %v422
            %s424 = scalar_lea.vmem [#allocation2], 88
            %v425 = vld [vmem:[%s424] sm:$0x1]
            %vm426 = vcmp.gt.f32.partialorder %v423, 0.0
            %v427 = vand.u32 2147483647, %v415
            %v428 = vsel %vm426, %v427, 0.0
            %v429 = vadd.f32 %v425, %v428
            %430 = vst [vmem:[%s424] sm:$0x1] %v429
            %s431 = scalar_lea.vmem [#allocation2], 96
            %v432 = vld [vmem:[%s431] sm:$0x1]
            %v433 = vadd.f32 %v432, %v423
            %434 = vst [vmem:[%s431] sm:$0x1] %v433
            %s435 = scalar_lea.vmem [#allocation4], 4
            %v436 = vld [vmem:[%s435] sm:$0x1]
            %v437 = vsub.f32 %v386, %v436
            %s438 = scalar_lea.vmem [#allocation4], 5
            %v439 = vld [vmem:[%s438] sm:$0x1]
            %v440 = vmul.f32 %v390, %v439
            %v441 = vand.u32 %v396, 3
            %vm442 = vcmp.eq.s32.totalorder %v441, 0
            %v443 = vsel %vm442, 1, 0
            %v444 = vcvt.s32.f32 %v443
            %v445 = vmul.f32 %v440, %v444
            %s446 = scalar_lea.vmem [#allocation2], 120
            %v447 = vld [vmem:[%s446] sm:$0x1]
            %vm448 = vcmp.gt.f32.partialorder %v445, 0.0
            %v449 = vand.u32 2147483647, %v437
            %v450 = vsel %vm448, %v449, 0.0
            %v451 = vadd.f32 %v447, %v450
            %452 = vst [vmem:[%s446] sm:$0x1] %v451
            %s453 = scalar_lea.vmem [#allocation2], 128
            %v454 = vld [vmem:[%s453] sm:$0x1]
            %v455 = vadd.f32 %v454, %v445
            %456 = vst [vmem:[%s453] sm:$0x1] %v455
            %s457 = scalar_lea.vmem [#allocation4], 6
            %v458 = vld [vmem:[%s457] sm:$0x1]
            %v459 = vsub.f32 %v386, %v458
            %s460 = scalar_lea.vmem [#allocation4], 7
            %v461 = vld [vmem:[%s460] sm:$0x1]
            %v462 = vmul.f32 %v390, %v461
            %v463 = vand.u32 %v396, 7
            %vm464 = vcmp.eq.s32.totalorder %v463, 0
            %v465 = vsel %vm464, 1, 0
            %v466 = vcvt.s32.f32 %v465
            %v467 = vmul.f32 %v462, %v466
            %s468 = scalar_lea.vmem [#allocation2], 152
            %v469 = vld [vmem:[%s468] sm:$0x1]
            %vm470 = vcmp.gt.f32.partialorder %v467, 0.0
            %v471 = vand.u32 2147483647, %v459
            %v472 = vsel %vm470, %v471, 0.0
            %v473 = vadd.f32 %v469, %v472
            %474 = vst [vmem:[%s468] sm:$0x1] %v473
            %s475 = scalar_lea.vmem [#allocation2], 160
            %v476 = vld [vmem:[%s475] sm:$0x1]
            %v477 = vadd.f32 %v476, %v467
            %478 = vst [vmem:[%s475] sm:$0x1] %v477
          $region56: #{tpu_custom_call.1} parent=51 // pred_fallthru
            _
          %479 = vrot.lane.b32.xlu0 %v386, 127
          %v480 = vpop.permute.xlu0 %479
          %v481 = vsub.f32 %v480, %v386
          %482 = vrot.lane.b32.xlu0 %v390, 127
          %v483 = vpop.permute.xlu0 %482
          %v484 = vmul.f32 %v483, %v390
          %v485 = vld [vmem:[#allocation3] sm:$0xff]
          %v486 = vmul.f32 %v484, %v485
          %s487 = scalar_lea.vmem [#allocation2], 40
          %v488 = vld [vmem:[%s487] sm:$0xff]
          %vm489 = vcmp.gt.f32.partialorder %v486, 0.0
          %v490 = vand.u32 2147483647, %v481
          %v491 = vsel %vm489, %v490, 0.0
          %v492 = vadd.f32 %v488, %v491
          %493 = vst [vmem:[%s487] sm:$0xff] %v492
          %s494 = scalar_lea.vmem [#allocation2], 48
          %v495 = vld [vmem:[%s494] sm:$0xff]
          %v496 = vadd.f32 %v495, %v486
          %497 = vst [vmem:[%s494] sm:$0xff] %v496
          %v498 = vrot.slane %v386, 1
          %v499 = vsub.f32 %v498, %v386
          %v500 = vrot.slane %v390, 1
          %v501 = vmul.f32 %v500, %v390
          %s502 = scalar_lea.vmem [#allocation3], 8
          %v503 = vld [vmem:[%s502] sm:$0xff]
          %v504 = vmul.f32 %v501, %v503
          %s505 = scalar_lea.vmem [#allocation2], 56
          %v506 = vld [vmem:[%s505] sm:$0xff]
          %vm507 = vcmp.gt.f32.partialorder %v504, 0.0
          %v508 = vand.u32 2147483647, %v499
          %v509 = vsel %vm507, %v508, 0.0
          %v510 = vadd.f32 %v506, %v509
          %511 = vst [vmem:[%s505] sm:$0xff] %v510
          %s512 = scalar_lea.vmem [#allocation2], 64
          %v513 = vld [vmem:[%s512] sm:$0xff]
          %v514 = vadd.f32 %v513, %v504
          %515 = vst [vmem:[%s512] sm:$0xff] %v514
          %516 = vrot.lane.b32.xlu0 %v386, 126
          %v517 = vpop.permute.xlu0 %516
          %v518 = vsub.f32 %v517, %v386
          %519 = vrot.lane.b32.xlu0 %v390, 126
          %v520 = vpop.permute.xlu0 %519
          %v521 = vmul.f32 %v520, %v390
          %s522 = scalar_lea.vmem [#allocation3], 16
          %v523 = vld [vmem:[%s522] sm:$0xff]
          %v524 = vmul.f32 %v521, %v523
          %s525 = scalar_lea.vmem [#allocation2], 72
          %v526 = vld [vmem:[%s525] sm:$0xff]
          %vm527 = vcmp.gt.f32.partialorder %v524, 0.0
          %v528 = vand.u32 2147483647, %v518
          %v529 = vsel %vm527, %v528, 0.0
          %v530 = vadd.f32 %v526, %v529
          %531 = vst [vmem:[%s525] sm:$0xff] %v530
          %s532 = scalar_lea.vmem [#allocation2], 80
          %v533 = vld [vmem:[%s532] sm:$0xff]
          %v534 = vadd.f32 %v533, %v524
          %535 = vst [vmem:[%s532] sm:$0xff] %v534
          %v536 = vrot.slane %v386, 2
          %v537 = vsub.f32 %v536, %v386
          %v538 = vrot.slane %v390, 2
          %v539 = vmul.f32 %v538, %v390
          %s540 = scalar_lea.vmem [#allocation3], 24
          %v541 = vld [vmem:[%s540] sm:$0xff]
          %v542 = vmul.f32 %v539, %v541
          %s543 = scalar_lea.vmem [#allocation2], 88
          %v544 = vld [vmem:[%s543] sm:$0xff]
          %vm545 = vcmp.gt.f32.partialorder %v542, 0.0
          %v546 = vand.u32 2147483647, %v537
          %v547 = vsel %vm545, %v546, 0.0
          %v548 = vadd.f32 %v544, %v547
          %549 = vst [vmem:[%s543] sm:$0xff] %v548
          %s550 = scalar_lea.vmem [#allocation2], 96
          %v551 = vld [vmem:[%s550] sm:$0xff]
          %v552 = vadd.f32 %v551, %v542
          %553 = vst [vmem:[%s550] sm:$0xff] %v552
          %554 = vrot.lane.b32.xlu0 %v386, 124
          %v555 = vpop.permute.xlu0 %554
          %v556 = vsub.f32 %v555, %v386
          %557 = vrot.lane.b32.xlu0 %v390, 124
          %v558 = vpop.permute.xlu0 %557
          %v559 = vmul.f32 %v558, %v390
          %s560 = scalar_lea.vmem [#allocation3], 32
          %v561 = vld [vmem:[%s560] sm:$0xff]
          %v562 = vmul.f32 %v559, %v561
          %s563 = scalar_lea.vmem [#allocation2], 104
          %v564 = vld [vmem:[%s563] sm:$0xff]
          %vm565 = vcmp.gt.f32.partialorder %v562, 0.0
          %v566 = vand.u32 2147483647, %v556
          %v567 = vsel %vm565, %v566, 0.0
          %v568 = vadd.f32 %v564, %v567
          %569 = vst [vmem:[%s563] sm:$0xff] %v568
          %s570 = scalar_lea.vmem [#allocation2], 112
          %v571 = vld [vmem:[%s570] sm:$0xff]
          %v572 = vadd.f32 %v571, %v562
          %573 = vst [vmem:[%s570] sm:$0xff] %v572
          %v574 = vrot.slane %v386, 4
          %v575 = vsub.f32 %v574, %v386
          %v576 = vrot.slane %v390, 4
          %v577 = vmul.f32 %v576, %v390
          %s578 = scalar_lea.vmem [#allocation3], 40
          %v579 = vld [vmem:[%s578] sm:$0xff]
          %v580 = vmul.f32 %v577, %v579
          %s581 = scalar_lea.vmem [#allocation2], 120
          %v582 = vld [vmem:[%s581] sm:$0xff]
          %vm583 = vcmp.gt.f32.partialorder %v580, 0.0
          %v584 = vand.u32 2147483647, %v575
          %v585 = vsel %vm583, %v584, 0.0
          %v586 = vadd.f32 %v582, %v585
          %587 = vst [vmem:[%s581] sm:$0xff] %v586
          %s588 = scalar_lea.vmem [#allocation2], 128
          %v589 = vld [vmem:[%s588] sm:$0xff]
          %v590 = vadd.f32 %v589, %v580
          %591 = vst [vmem:[%s588] sm:$0xff] %v590
          %592 = vrot.lane.b32.xlu0 %v386, 120
          %v593 = vpop.permute.xlu0 %592
          %v594 = vsub.f32 %v593, %v386
          %595 = vrot.lane.b32.xlu0 %v390, 120
          %v596 = vpop.permute.xlu0 %595
          %v597 = vmul.f32 %v596, %v390
          %s598 = scalar_lea.vmem [#allocation3], 48
          %v599 = vld [vmem:[%s598] sm:$0xff]
          %v600 = vmul.f32 %v597, %v599
          %s601 = scalar_lea.vmem [#allocation2], 136
          %v602 = vld [vmem:[%s601] sm:$0xff]
          %vm603 = vcmp.gt.f32.partialorder %v600, 0.0
          %v604 = vand.u32 2147483647, %v594
          %v605 = vsel %vm603, %v604, 0.0
          %v606 = vadd.f32 %v602, %v605
          %607 = vst [vmem:[%s601] sm:$0xff] %v606
          %s608 = scalar_lea.vmem [#allocation2], 144
          %v609 = vld [vmem:[%s608] sm:$0xff]
          %v610 = vadd.f32 %v609, %v600
          %611 = vst [vmem:[%s608] sm:$0xff] %v610
          %612 = vst [vmem:[#allocation4 - $0x7] sm:$0x80] %v386
          %s613 = scalar_lea.vmem [#allocation4], 1
          %614 = vst [vmem:[%s613 - $0x7] sm:$0x80] %v390
          %s615 = scalar_lea.vmem [#allocation4], 2
          %616 = vst [vmem:[%s615 - $0x6] sm:$0x40] %v386
          %s617 = scalar_lea.vmem [#allocation4], 3
          %618 = vst [vmem:[%s617 - $0x6] sm:$0x40] %v390
          %s619 = scalar_lea.vmem [#allocation4], 4
          %620 = vst [vmem:[%s619 - $0x4] sm:$0x10] %v386
          %s621 = scalar_lea.vmem [#allocation4], 5
          %622 = vst [vmem:[%s621 - $0x4] sm:$0x10] %v390
          %s623 = scalar_lea.vmem [#allocation4], 6
          %624 = vst [vmem:[%s623] sm:$0x1] %v386
          %s625 = scalar_lea.vmem [#allocation4], 7
          %626 = vst [vmem:[%s625] sm:$0x1] %v390
        $region52: #{tpu_custom_call.1} parent=31 // pred_fallthru
          _
        %p627 = pnand %p254, %p253
        %p628 = pneg %p627
        // Predicated region
        $region57: #{tpu_custom_call.1} parent=31 // pred_check
          _
        $region58: #{tpu_custom_call.1} parent=31 // pred_check_branch
          %630 = sbr.rel (%p627) target = $region60
        $region59: #{tpu_custom_call.1} parent=31 // pred_region
          %v631 = vld [vmem:[#allocation2] sm:$0xff]
          %632 = vadd.xlane.f32.xlu0 %v631
          %v633 = vpop.xlane.xlu0 %632
          %v634 = vrot.slane %v633, 4
          %v635 = vadd.f32 %v633, %v634
          %v636 = vrot.slane %v635, 2
          %v637 = vadd.f32 %v635, %v636
          %v638 = vrot.slane %v637, 1
          %v639 = vadd.f32 %v637, %v638
          %s640 = scalar_lea.vmem [#allocation2], 8
          %v641 = vld [vmem:[%s640] sm:$0xff]
          %642 = vadd.xlane.f32.xlu0 %v641
          %v643 = vpop.xlane.xlu0 %642
          %v644 = vrot.slane %v643, 4
          %v645 = vadd.f32 %v643, %v644
          %v646 = vrot.slane %v645, 2
          %v647 = vadd.f32 %v645, %v646
          %v648 = vrot.slane %v647, 1
          %v649 = vadd.f32 %v647, %v648
          %v650 = vrcp.pop %v649
          %v651 = vmul.f32 %v639, %v650
          %s652 = scalar_lea.vmem [#allocation2], 16
          %v653 = vld [vmem:[%s652] sm:$0xff]
          %654 = vadd.xlane.f32.xlu0 %v653
          %v655 = vpop.xlane.xlu0 %654
          %v656 = vrot.slane %v655, 4
          %v657 = vadd.f32 %v655, %v656
          %v658 = vrot.slane %v657, 2
          %v659 = vadd.f32 %v657, %v658
          %v660 = vrot.slane %v659, 1
          %v661 = vadd.f32 %v659, %v660
          %s662 = scalar_lea.vmem [#allocation2], 24
          %v663 = vld [vmem:[%s662] sm:$0xff]
          %664 = vadd.xlane.f32.xlu0 %v663
          %v665 = vpop.xlane.xlu0 %664
          %v666 = vrot.slane %v665, 4
          %v667 = vadd.f32 %v665, %v666
          %v668 = vrot.slane %v667, 2
          %v669 = vadd.f32 %v667, %v668
          %v670 = vrot.slane %v669, 1
          %v671 = vadd.f32 %v669, %v670
          %v672 = vrcp.pop %v671
          %v673 = vmul.f32 %v661, %v672
          %v674 = vrcp.pop %v651
          %v675 = vmul.f32 1.0, %v674
          %s676 = vtos %v675
          %s677 = scalar_lea.smem [#allocation5], 0
          %678 = sst [smem:[%s677]] %s676
          %v679 = vrcp.pop %v673
          %v680 = vmul.f32 1.0, %v679
          %s681 = vtos %v680
          %s682 = scalar_lea.smem [#allocation5], 1
          %683 = sst [smem:[%s682]] %s681
        $region60: #{tpu_custom_call.1} parent=31 // pred_fallthru
          _
        %p684 = scmp.eq.s32.totalorder %s27, 1
        // Predicated region
        $region61: #{tpu_custom_call.1} parent=31 // pred_check
          %p685 = pneg %p684
        $region62: #{tpu_custom_call.1} parent=31 // pred_check_branch
          %687 = sbr.rel (%p685) target = $region64
        $region63: #{tpu_custom_call.1} parent=31 // pred_region
          %v688 = vld [vmem:[%s217] sm:$0xff]
          %v689 = vld [vmem:[%s226] sm:$0xff]
          %s690 = sld [smem:[#allocation6]]
          %v691 = vstv %s690
          %v692 = vsub.f32 %v688, %v691
          %s693 = sld [smem:[#allocation5]]
          %v694 = vstv %s693
          %v695 = vmul.f32 %v692, %v694
          %s696 = sld [smem:[#allocation6 + $0x1]]
          %v697 = vstv %s696
          %v698 = vsub.f32 %v689, %v697
          %s699 = sld [smem:[#allocation5 + $0x1]]
          %v700 = vstv %s699
          %v701 = vmul.f32 %v698, %v700
          %vm702 = vweird.f32 %v695
          %vm703 = vmxor %vm702, 1
          %s704 = scalar_lea.vmem [#allocation2], 32
          %v705 = vld [vmem:[%s704] sm:$0xff]
          %v706 = vsub.f32 %v701, %v695
          %v707 = vand.u32 2147483647, %v706
          %v708 = vsel %vm703, %v707, 0.0
          %v709 = vadd.f32 %v705, %v708
          %710 = vst [vmem:[%s704] sm:$0xff] %v709
        $region64: #{tpu_custom_call.1} parent=31 // pred_fallthru
          _
        %p711 = pnand %p684, %p253
        %p712 = pneg %p711
        // Predicated region
        $region65: #{tpu_custom_call.1} parent=31 // pred_check
          _
        $region66: #{tpu_custom_call.1} parent=31 // pred_check_branch
          %714 = sbr.rel (%p711) target = $region68
        $region67: #{tpu_custom_call.1} parent=31 // pred_region
          %s715 = scalar_lea.vmem [#allocation2], 32
          %v716 = vld [vmem:[%s715] sm:$0xff]
          %717 = vadd.xlane.f32.xlu0 %v716
          %v718 = vpop.xlane.xlu0 %717
          %v719 = vrot.slane %v718, 4
          %v720 = vadd.f32 %v718, %v719
          %v721 = vrot.slane %v720, 2
          %v722 = vadd.f32 %v720, %v721
          %v723 = vrot.slane %v722, 1
          %v724 = vadd.f32 %v722, %v723
          %v725 = vmul.f32 %v724, 0.001953125
          %s726 = scalar_lea.vmem [#allocation2], 40
          %v727 = vld [vmem:[%s726] sm:$0xff]
          %728 = vadd.xlane.f32.xlu0 %v727
          %v729 = vpop.xlane.xlu0 %728
          %v730 = vrot.slane %v729, 4
          %v731 = vadd.f32 %v729, %v730
          %v732 = vrot.slane %v731, 2
          %v733 = vadd.f32 %v731, %v732
          %v734 = vrot.slane %v733, 1
          %v735 = vadd.f32 %v733, %v734
          %s736 = scalar_lea.vmem [#allocation2], 48
          %v737 = vld [vmem:[%s736] sm:$0xff]
          %738 = vadd.xlane.f32.xlu0 %v737
          %v739 = vpop.xlane.xlu0 %738
          %v740 = vrot.slane %v739, 4
          %v741 = vadd.f32 %v739, %v740
          %v742 = vrot.slane %v741, 2
          %v743 = vadd.f32 %v741, %v742
          %v744 = vrot.slane %v743, 1
          %v745 = vadd.f32 %v743, %v744
          %v746 = vrcp.pop %v745
          %v747 = vmul.f32 %v735, %v746
          %s748 = scalar_lea.vmem [#allocation2], 56
          %v749 = vld [vmem:[%s748] sm:$0xff]
          %750 = vadd.xlane.f32.xlu0 %v749
          %v751 = vpop.xlane.xlu0 %750
          %v752 = vrot.slane %v751, 4
          %v753 = vadd.f32 %v751, %v752
          %v754 = vrot.slane %v753, 2
          %v755 = vadd.f32 %v753, %v754
          %v756 = vrot.slane %v755, 1
          %v757 = vadd.f32 %v755, %v756
          %s758 = scalar_lea.vmem [#allocation2], 64
          %v759 = vld [vmem:[%s758] sm:$0xff]
          %760 = vadd.xlane.f32.xlu0 %v759
          %v761 = vpop.xlane.xlu0 %760
          %v762 = vrot.slane %v761, 4
          %v763 = vadd.f32 %v761, %v762
          %v764 = vrot.slane %v763, 2
          %v765 = vadd.f32 %v763, %v764
          %v766 = vrot.slane %v765, 1
          %v767 = vadd.f32 %v765, %v766
          %v768 = vrcp.pop %v767
          %v769 = vmul.f32 %v757, %v768
          %v770 = vadd.f32 %v747, %v769
          %v771 = vmul.f32 %v770, 0.5
          %v772 = vadd.f32 %v771, 0.0
          %s773 = scalar_lea.vmem [#allocation2], 72
          %v774 = vld [vmem:[%s773] sm:$0xff]
          %775 = vadd.xlane.f32.xlu0 %v774
          %v776 = vpop.xlane.xlu0 %775
          %v777 = vrot.slane %v776, 4
          %v778 = vadd.f32 %v776, %v777
          %v779 = vrot.slane %v778, 2
          %v780 = vadd.f32 %v778, %v779
          %v781 = vrot.slane %v780, 1
          %v782 = vadd.f32 %v780, %v781
          %s783 = scalar_lea.vmem [#allocation2], 80
          %v784 = vld [vmem:[%s783] sm:$0xff]
          %785 = vadd.xlane.f32.xlu0 %v784
          %v786 = vpop.xlane.xlu0 %785
          %v787 = vrot.slane %v786, 4
          %v788 = vadd.f32 %v786, %v787
          %v789 = vrot.slane %v788, 2
          %v790 = vadd.f32 %v788, %v789
          %v791 = vrot.slane %v790, 1
          %v792 = vadd.f32 %v790, %v791
          %v793 = vrcp.pop %v792
          %v794 = vmul.f32 %v782, %v793
          %s795 = scalar_lea.vmem [#allocation2], 88
          %v796 = vld [vmem:[%s795] sm:$0xff]
          %797 = vadd.xlane.f32.xlu0 %v796
          %v798 = vpop.xlane.xlu0 %797
          %v799 = vrot.slane %v798, 4
          %v800 = vadd.f32 %v798, %v799
          %v801 = vrot.slane %v800, 2
          %v802 = vadd.f32 %v800, %v801
          %v803 = vrot.slane %v802, 1
          %v804 = vadd.f32 %v802, %v803
          %s805 = scalar_lea.vmem [#allocation2], 96
          %v806 = vld [vmem:[%s805] sm:$0xff]
          %807 = vadd.xlane.f32.xlu0 %v806
          %v808 = vpop.xlane.xlu0 %807
          %v809 = vrot.slane %v808, 4
          %v810 = vadd.f32 %v808, %v809
          %v811 = vrot.slane %v810, 2
          %v812 = vadd.f32 %v810, %v811
          %v813 = vrot.slane %v812, 1
          %v814 = vadd.f32 %v812, %v813
          %v815 = vrcp.pop %v814
          %v816 = vmul.f32 %v804, %v815
          %v817 = vadd.f32 %v794, %v816
          %v818 = vmul.f32 %v817, 0.5
          %v819 = vadd.f32 %v772, %v818
          %s820 = scalar_lea.vmem [#allocation2], 104
          %v821 = vld [vmem:[%s820] sm:$0xff]
          %822 = vadd.xlane.f32.xlu0 %v821
          %v823 = vpop.xlane.xlu0 %822
          %v824 = vrot.slane %v823, 4
          %v825 = vadd.f32 %v823, %v824
          %v826 = vrot.slane %v825, 2
          %v827 = vadd.f32 %v825, %v826
          %v828 = vrot.slane %v827, 1
          %v829 = vadd.f32 %v827, %v828
          %s830 = scalar_lea.vmem [#allocation2], 112
          %v831 = vld [vmem:[%s830] sm:$0xff]
          %832 = vadd.xlane.f32.xlu0 %v831
          %v833 = vpop.xlane.xlu0 %832
          %v834 = vrot.slane %v833, 4
          %v835 = vadd.f32 %v833, %v834
          %v836 = vrot.slane %v835, 2
          %v837 = vadd.f32 %v835, %v836
          %v838 = vrot.slane %v837, 1
          %v839 = vadd.f32 %v837, %v838
          %v840 = vrcp.pop %v839
          %v841 = vmul.f32 %v829, %v840
          %s842 = scalar_lea.vmem [#allocation2], 120
          %v843 = vld [vmem:[%s842] sm:$0xff]
          %844 = vadd.xlane.f32.xlu0 %v843
          %v845 = vpop.xlane.xlu0 %844
          %v846 = vrot.slane %v845, 4
          %v847 = vadd.f32 %v845, %v846
          %v848 = vrot.slane %v847, 2
          %v849 = vadd.f32 %v847, %v848
          %v850 = vrot.slane %v849, 1
          %v851 = vadd.f32 %v849, %v850
          %s852 = scalar_lea.vmem [#allocation2], 128
          %v853 = vld [vmem:[%s852] sm:$0xff]
          %854 = vadd.xlane.f32.xlu0 %v853
          %v855 = vpop.xlane.xlu0 %854
          %v856 = vrot.slane %v855, 4
          %v857 = vadd.f32 %v855, %v856
          %v858 = vrot.slane %v857, 2
          %v859 = vadd.f32 %v857, %v858
          %v860 = vrot.slane %v859, 1
          %v861 = vadd.f32 %v859, %v860
          %v862 = vrcp.pop %v861
          %v863 = vmul.f32 %v851, %v862
          %v864 = vadd.f32 %v841, %v863
          %v865 = vmul.f32 %v864, 0.5
          %v866 = vadd.f32 %v819, %v865
          %s867 = scalar_lea.vmem [#allocation2], 136
          %v868 = vld [vmem:[%s867] sm:$0xff]
          %869 = vadd.xlane.f32.xlu0 %v868
          %v870 = vpop.xlane.xlu0 %869
          %v871 = vrot.slane %v870, 4
          %v872 = vadd.f32 %v870, %v871
          %v873 = vrot.slane %v872, 2
          %v874 = vadd.f32 %v872, %v873
          %v875 = vrot.slane %v874, 1
          %v876 = vadd.f32 %v874, %v875
          %s877 = scalar_lea.vmem [#allocation2], 144
          %v878 = vld [vmem:[%s877] sm:$0xff]
          %879 = vadd.xlane.f32.xlu0 %v878
          %v880 = vpop.xlane.xlu0 %879
          %v881 = vrot.slane %v880, 4
          %v882 = vadd.f32 %v880, %v881
          %v883 = vrot.slane %v882, 2
          %v884 = vadd.f32 %v882, %v883
          %v885 = vrot.slane %v884, 1
          %v886 = vadd.f32 %v884, %v885
          %v887 = vrcp.pop %v886
          %v888 = vmul.f32 %v876, %v887
          %s889 = scalar_lea.vmem [#allocation2], 152
          %v890 = vld [vmem:[%s889] sm:$0xff]
          %891 = vadd.xlane.f32.xlu0 %v890
          %v892 = vpop.xlane.xlu0 %891
          %v893 = vrot.slane %v892, 4
          %v894 = vadd.f32 %v892, %v893
          %v895 = vrot.slane %v894, 2
          %v896 = vadd.f32 %v894, %v895
          %v897 = vrot.slane %v896, 1
          %v898 = vadd.f32 %v896, %v897
          %s899 = scalar_lea.vmem [#allocation2], 160
          %v900 = vld [vmem:[%s899] sm:$0xff]
          %901 = vadd.xlane.f32.xlu0 %v900
          %v902 = vpop.xlane.xlu0 %901
          %v903 = vrot.slane %v902, 4
          %v904 = vadd.f32 %v902, %v903
          %v905 = vrot.slane %v904, 2
          %v906 = vadd.f32 %v904, %v905
          %v907 = vrot.slane %v906, 1
          %v908 = vadd.f32 %v906, %v907
          %v909 = vrcp.pop %v908
          %v910 = vmul.f32 %v898, %v909
          %v911 = vadd.f32 %v888, %v910
          %v912 = vmul.f32 %v911, 0.5
          %v913 = vadd.f32 %v866, %v912
          %v914 = vmul.f32 %v913, 0.25
          %v915 = vmul.f32 %v914, 0.5
          %v916 = vadd.f32 %v725, %v915
          %vm917 = vcmask 0
          %918 = vst.msk [vmem:[#allocation13] sm:$0x1] %vm917, %v916
        $region68: #{tpu_custom_call.1} parent=31 // pred_fallthru
          _
        // Predicated region
        $region69: #{tpu_custom_call.1} parent=31 // pred_check
          %p919 = pneg %p131
        $region70: #{tpu_custom_call.1} parent=31 // pred_check_branch
          %921 = sbr.rel (%p919) target = $region72
        $region71: #{tpu_custom_call.1} parent=31 // pred_region
          %s923 = ssub.s32 16, 16
          %924 = vsyncadd [#allocation8], %s923
          %s926 = sshll.u32 [#allocation13], 4
          %s927 = int_to_ptr.vmem [resolvable:$true] %s926
          %929 = dma.vmem_to_hbm [thread:$0]  %s927, 16, %s3, [#allocation8]
        $region72: #{tpu_custom_call.1} parent=31 // pred_fallthru
          _
        // Predicated region
        $region73: #{tpu_custom_call.1} parent=31 // pred_check
          %p930 = pneg %p131
        $region74: #{tpu_custom_call.1} parent=31 // pred_check_branch
          %932 = sbr.rel (%p930) target = $region76
        $region75: #{tpu_custom_call.1} parent=31 // pred_region
          %933 = dma.done [#allocation8], 16
        $region76: #{tpu_custom_call.1} parent=31 // pred_fallthru
          _
      $region32: #{tpu_custom_call.1} parent=5 // pred_fallthru
        _
      %p934 = scmp.le.s32.totalorder 2, %s17
      // Predicated region
      $region77: #{tpu_custom_call.1} parent=5 // pred_check
        %p935 = pneg %p934
      $region78: #{tpu_custom_call.1} parent=5 // pred_check_branch
        %937 = sbr.rel (%p935) target = $region80
      $region79: #{tpu_custom_call.1} parent=5 // pred_region
        %s938 = ssub.s32 %s17, 2
      $region80: #{tpu_custom_call.1} parent=5 // pred_fallthru
        _
    $region6: #{tpu_custom_call.1} parent=1 // loop_footer
      %s21 = sadd.s32 1, %s17
    $region7: #{tpu_custom_call.1} parent=1 // loop_footer_branch
      %16 = sbr.rel target = $region3
    $region8: #{tpu_custom_call.1} parent=1 // loop_exit
      _
    %939 = vsyncpa [#allocation7], 1
    %s940 = scalar_lea.sflag [#allocation7], 1
    %941 = vsyncpa %s940, 1
    %942 = vsyncpa [#allocation12], 1
    %s943 = scalar_lea.sflag [#allocation12], 1
    %944 = vsyncpa %s943, 1
    %945 = vsyncpa [#allocation8], 1
    %s946 = scalar_lea.sflag [#allocation8], 1
    %947 = vsyncpa %s946, 1
    %948 = vsyncpa [#allocation9], 1
    %s949 = scalar_lea.sflag [#allocation9], 1
    %950 = vsyncpa %s949, 1

</llo_original>
